<compile_context>
chip_gen: v5e
topology: v5e:2x2
jax: 0.10.0
libtpu: 0.0.40
codegen_flags: <defaults>
</compile_context>

<pallas_src>
import functools

import jax
import jax.numpy as jnp
from jax import lax
from jax.experimental import pallas as pl
from jax.experimental.pallas import tpu as pltpu

BN_EPS = 1e-5


def _round_up(v, m):
    return ((v + m - 1) // m) * m


# ------------------------------ Pallas kernel ------------------------------ #
def _mlp_forward_kernel(*refs, e_layers, g_layers, b_real, b_pad):
    """Fused encoder -> reparameterized sample -> decoder forward pass.

    refs = (x, eps, enc_w[0..e_layers), w_head, b_head,
            dec_w[0..g_layers), w_out, b_out, out)
    """
    x_ref, eps_ref = refs[0], refs[1]
    rest = list(refs[2:])
    o_ref = rest.pop()                                   # single output ref
    enc_ws = rest[:e_layers]
    whead_ref, bhead_ref = rest[e_layers:e_layers + 2]
    dec_ws = rest[e_layers + 2:e_layers + 2 + g_layers]
    wout_ref, bout_ref = rest[e_layers + 2 + g_layers:]

    bp = x_ref.shape[0]
    z_dim = eps_ref.shape[1]
    inv_b = 1.0 / float(b_real)
    need_mask = b_pad > 0
    if need_mask:
        row_ids = lax.broadcasted_iota(jnp.int32, (bp, 1), 0)
        row_mask = (row_ids < b_real).astype(jnp.float32)

    def bn_relu(y):
        # Training-mode BatchNorm1d: batch statistics, biased (divide-by-B)
        # variance, eps=1e-5, gamma=1 / beta=0 (kaiming_init).  Single-pass
        # sums: padded batch rows carry exact zeros (zero inputs, no bias),
        # so they contribute nothing to either sum.
        s1 = jnp.sum(y, axis=0, keepdims=True)
        s2 = jnp.sum(y * y, axis=0, keepdims=True)
        mean = s1 * inv_b
        var = jnp.maximum(s2 * inv_b - mean * mean, 0.0)
        y = (y - mean) * lax.rsqrt(var + BN_EPS)
        y = jnp.maximum(y, 0.0)
        if need_mask:
            y = y * row_mask   # keep pad rows zero for the next layer's stats
        return y

    def matmul(h, w_ref):
        # bf16 MXU operands, f32 accumulation.  astype is a no-op when h is
        # already bf16 (first encoder layer).
        return jnp.dot(h.astype(jnp.bfloat16), w_ref[...],
                       preferred_element_type=jnp.float32)

    # ------------------------------- encoder ------------------------------- #
    h = x_ref[...]                                   # bf16, K padded to 896
    for w_ref in enc_ws:          # Linear (bias folded away by BN) + BN + ReLU
        h = bn_relu(matmul(h, w_ref))
    zh = matmul(h, whead_ref) + bhead_ref[...]       # fused (mu | logv) head
    mu = zh[:, :z_dim]                               # z[..., 0]
    logv = zh[:, z_dim:]                             # z[..., 1]

    # ------------- sampling_model: Normal(mu, exp(0.5*logv)).rsample -------- #
    s = mu + jnp.exp(0.5 * logv) * eps_ref[...]
    if need_mask:
        s = s * row_mask

    # ------------------------------- decoder ------------------------------- #
    h = s
    for w_ref in dec_ws:
        h = bn_relu(matmul(h, w_ref))
    y = matmul(h, wout_ref) + bout_ref[...]
    # sigmoid(y) == 0.5 * tanh(0.5*y) + 0.5 : one EUP tanh on the widest tensor
    o_ref[...] = 0.5 * jnp.tanh(0.5 * y) + 0.5       # input_normalize_sym=False


# -------------------------------- JAX glue --------------------------------- #
def mlp_model_forward(params, x, eps):
    """x: (B, 1, 28, 28) NCHW; eps: (B, z_dim) standard-normal reparam noise.

    Returns x_recon with the same shape as x (View((-1, 1, 28, 28)) + sigmoid).
    """
    B = x.shape[0]
    x2d = x.reshape(B, -1).astype(jnp.bfloat16)       # nn.Flatten(), bf16 MXU LHS
    d_out = x2d.shape[1]                              # prod(input_dims) == 784
    k_pad = params["enc_ws"][0].shape[0]              # lane-aligned K (896)
    d_out_pad = params["dec_out_w"].shape[1]          # lane-dense padded width

    bp = _round_up(max(B, 16), 16)                    # bf16 sublane tile (16,128)
    pad_rows = bp - B
    x2d = jnp.pad(x2d, ((0, pad_rows), (0, k_pad - d_out)))
    eps = eps.astype(jnp.float32)
    if pad_rows:
        eps = jnp.pad(eps, ((0, pad_rows), (0, 0)))

    operands = ([x2d, eps] + list(params["enc_ws"])
                + [params["enc_head_w"], params["enc_head_b"]]
                + list(params["dec_ws"])
                + [params["dec_out_w"], params["dec_out_b"]])

    def full_spec(a, bufs=None):
        nd = a.ndim
        if bufs is None:
            return pl.BlockSpec(a.shape, lambda i, _n=nd: (0,) * _n)
        # grid=(1,): no pipelining benefit, so single-buffer the big operands.
        return pl.BlockSpec(a.shape, lambda i, _n=nd: (0,) * _n,
                            pipeline_mode=pl.Buffered(bufs))

    in_specs = ([full_spec(x2d, bufs=1), full_spec(eps)]
                + [full_spec(a) for a in operands[2:]])
    out_spec = pl.BlockSpec((bp, d_out_pad), lambda i: (0, 0),
                            pipeline_mode=pl.Buffered(1))

    kernel = functools.partial(
        _mlp_forward_kernel,
        e_layers=len(params["enc_ws"]), g_layers=len(params["dec_ws"]),
        b_real=B, b_pad=pad_rows)

    out = pl.pallas_call(
        kernel,
        out_shape=jax.ShapeDtypeStruct((bp, d_out_pad), jnp.float32),
        grid=(1,),
        in_specs=in_specs,
        out_specs=out_spec,
        compiler_params=pltpu.CompilerParams(
            dimension_semantics=("arbitrary",),
            # ~2 MiB used at small batch; keep the cap <= ~48 MiB on v7x
            # (64 MiB physical VMEM) -- see TODO(synk) for the tiled path.
            vmem_limit_bytes=32 * 1024 * 1024),
    )(*operands)

    x_flat = out[:B, :d_out]                          # drop batch / lane padding
    return x_flat.reshape(x.shape)                    # View((-1, 1, 28, 28))


# ---------------------------- Parameters / init ----------------------------- #
def init_params(key, *, z_dim=10, input_dims=(28, 28, 1),
                e_num_layers=2, g_num_layers=2,
                e_num_filters=256, g_num_filters=256):
    """Kaiming-normal Linear weights (bias=0), BN gamma=1/beta=0 (implicit).

    Weights are stored in the kernel layout: (in, out), bf16 for the MXU.
    The final encoder Linear(., 2*z_dim) is de-interleaved (even cols -> mu,
    odd cols -> std, matching View((-1, z_dim, 2))) and stored as ONE fused
    head weight of shape (fan, 2*z_dim) = [mu cols | std cols].
    The first encoder weight's rows and the decoder output weight's columns
    are zero-padded to multiples of 128 for lane alignment.
    """
    d_in = 1
    for d in input_dims:
        d_in *= d
    k_pad = _round_up(d_in, 128)                         # 784 -> 896
    d_out_pad = _round_up(d_in, 128)                     # lane-dense output width

    def kaiming(k, fan_in, fan_out):
        w = jax.random.normal(k, (fan_in, fan_out), jnp.float32)
        return w * jnp.sqrt(2.0 / fan_in)

    ks = list(jax.random.split(key, e_num_layers + g_num_layers + 2))
    p = {"enc_ws": [], "dec_ws": []}

    fan = d_in
    for li in range(e_num_layers):
        w = kaiming(ks.pop(), fan, e_num_filters)
        if li == 0:
            w = jnp.pad(w, ((0, k_pad - fan), (0, 0)))   # zero rows: no-op in matmul
        p["enc_ws"].append(w.astype(jnp.bfloat16))
        fan = e_num_filters

    w_z = kaiming(ks.pop(), fan, 2 * z_dim)
    # fused head: [mu columns | std columns]
    p["enc_head_w"] = jnp.concatenate(
        [w_z[:, 0::2], w_z[:, 1::2]], axis=1).astype(jnp.bfloat16)
    p["enc_head_b"] = jnp.zeros((1, 2 * z_dim), jnp.float32)  # zeroed by kaiming_init

    fan = z_dim
    for _ in range(g_num_layers):
        p["dec_ws"].append(kaiming(ks.pop(), fan, g_num_filters).astype(jnp.bfloat16))
        fan = g_num_filters
    w_out = kaiming(ks.pop(), fan, d_in)
    p["dec_out_w"] = jnp.pad(
        w_out, ((0, 0), (0, d_out_pad - d_in))).astype(jnp.bfloat16)
    p["dec_out_b"] = jnp.zeros((1, d_out_pad), jnp.float32)
    return p


if __name__ == "__main__":
    key = jax.random.PRNGKey(0)
    pkey, xkey, ekey = jax.random.split(key, 3)

    z_dim = 10
    params = init_params(pkey, z_dim=z_dim, input_dims=(28, 28, 1),
                         e_num_layers=2, g_num_layers=2,
                         e_num_filters=256, g_num_filters=256)

    B = 2
    x = jax.random.uniform(xkey, (B, 1, 28, 28), jnp.float32)       # MNIST-like
    eps = jax.random.normal(ekey, (B, z_dim), jnp.float32)          # rsample noise

    x_recon = jax.jit(mlp_model_forward)(params, x, eps)
    jax.block_until_ready(x_recon)

    assert x_recon.shape == (B, 1, 28, 28), x_recon.shape
    assert bool(jnp.all(jnp.isfinite(x_recon)))
    assert bool(jnp.all((x_recon >= 0.0) & (x_recon <= 1.0)))
    print("KERNEL_OK")
</pallas_src>

<mosaic_0001>
module attributes {stable_mosaic.version = 11 : i64} {
  func.func @_mlp_forward_kernel(%arg0: i32, %arg1: memref<16x896xbf16, #tpu.memory_space<vmem>>, %arg2: memref<16x10xf32, #tpu.memory_space<vmem>>, %arg3: memref<896x256xbf16, #tpu.memory_space<vmem>>, %arg4: memref<256x256xbf16, #tpu.memory_space<vmem>>, %arg5: memref<256x20xbf16, #tpu.memory_space<vmem>>, %arg6: memref<1x20xf32, #tpu.memory_space<vmem>>, %arg7: memref<10x256xbf16, #tpu.memory_space<vmem>>, %arg8: memref<256x256xbf16, #tpu.memory_space<vmem>>, %arg9: memref<256x896xbf16, #tpu.memory_space<vmem>>, %arg10: memref<1x896xf32, #tpu.memory_space<vmem>>, %arg11: memref<16x896xf32, #tpu.memory_space<vmem>>) attributes {dimension_semantics = [#tpu.dimension_semantics<arbitrary>], iteration_bounds = array<i64: 1>, scalar_prefetch = 0 : i64, scratch_operands = 0 : i64, tpu.core_type = #tpu.core_type<tc>, window_params = [{pipeline_mode = #tpu.pipeline_mode<synchronous>, transform_indices = @transform_0, window_bounds = array<i64: 16, 896>}, {pipeline_mode = #tpu.pipeline_mode<synchronous>, transform_indices = @transform_1, window_bounds = array<i64: 16, 10>}, {pipeline_mode = #tpu.pipeline_mode<synchronous>, transform_indices = @transform_2, window_bounds = array<i64: 896, 256>}, {pipeline_mode = #tpu.pipeline_mode<synchronous>, transform_indices = @transform_3, window_bounds = array<i64: 256, 256>}, {pipeline_mode = #tpu.pipeline_mode<synchronous>, transform_indices = @transform_4, window_bounds = array<i64: 256, 20>}, {pipeline_mode = #tpu.pipeline_mode<synchronous>, transform_indices = @transform_5, window_bounds = array<i64: 1, 20>}, {pipeline_mode = #tpu.pipeline_mode<synchronous>, transform_indices = @transform_6, window_bounds = array<i64: 10, 256>}, {pipeline_mode = #tpu.pipeline_mode<synchronous>, transform_indices = @transform_7, window_bounds = array<i64: 256, 256>}, {pipeline_mode = #tpu.pipeline_mode<synchronous>, transform_indices = @transform_8, window_bounds = array<i64: 256, 896>}, {pipeline_mode = #tpu.pipeline_mode<synchronous>, transform_indices = @transform_9, window_bounds = array<i64: 1, 896>}, {pipeline_mode = #tpu.pipeline_mode<synchronous>, transform_indices = @transform_10, window_bounds = array<i64: 16, 896>}]} {
    %0 = tpu.iota {dimensions = array<i32: 0>} : vector<16x1xi32>
    %c2_i32 = arith.constant 2 : i32
    %1 = vector.broadcast %c2_i32 : i32 to vector<16x1xi32>
    %2 = arith.cmpi slt, %0, %1 : vector<16x1xi32>
    %3 = arith.extui %2 : vector<16x1xi1> to vector<16x1xi32>
    %4 = arith.sitofp %3 : vector<16x1xi32> to vector<16x1xf32>
    %c0 = arith.constant 0 : index
    %c0_0 = arith.constant 0 : index
    %5 = vector.load %arg1[%c0, %c0_0] : memref<16x896xbf16, #tpu.memory_space<vmem>>, vector<16x896xbf16>
    %c0_1 = arith.constant 0 : index
    %c0_2 = arith.constant 0 : index
    %6 = vector.load %arg3[%c0_1, %c0_2] : memref<896x256xbf16, #tpu.memory_space<vmem>>, vector<896x256xbf16>
    %cst = arith.constant dense<0.000000e+00> : vector<16x256xf32>
    %7 = tpu.matmul %5, %6, %cst {dimension_numbers = #tpu.dot_dimension_numbers<[1], [0], [0], [1], [0, 0, 1, 1], [], []>} : vector<16x896xbf16>, vector<896x256xbf16>, vector<16x256xf32> -> vector<16x256xf32>
    %cst_3 = arith.constant dense<0.000000e+00> : vector<256xf32>
    %8 = vector.multi_reduction <add>, %7, %cst_3 [0] : vector<16x256xf32> to vector<256xf32>
    %9 = vector.shape_cast %8 : vector<256xf32> to vector<1x256xf32>
    %10 = arith.mulf %7, %7 : vector<16x256xf32>
    %cst_4 = arith.constant dense<0.000000e+00> : vector<256xf32>
    %11 = vector.multi_reduction <add>, %10, %cst_4 [0] : vector<16x256xf32> to vector<256xf32>
    %12 = vector.shape_cast %11 : vector<256xf32> to vector<1x256xf32>
    %cst_5 = arith.constant 5.000000e-01 : f32
    %13 = vector.broadcast %cst_5 : f32 to vector<1x256xf32>
    %14 = arith.mulf %9, %13 : vector<1x256xf32>
    %cst_6 = arith.constant 5.000000e-01 : f32
    %15 = vector.broadcast %cst_6 : f32 to vector<1x256xf32>
    %16 = arith.mulf %12, %15 : vector<1x256xf32>
    %17 = arith.mulf %14, %14 : vector<1x256xf32>
    %18 = arith.subf %16, %17 : vector<1x256xf32>
    %cst_7 = arith.constant 0.000000e+00 : f32
    %19 = vector.broadcast %cst_7 : f32 to vector<1x256xf32>
    %20 = arith.maximumf %18, %19 : vector<1x256xf32>
    %21 = vector.broadcast %14 : vector<1x256xf32> to vector<16x256xf32>
    %22 = arith.subf %7, %21 : vector<16x256xf32>
    %cst_8 = arith.constant 9.99999974E-6 : f32
    %23 = vector.broadcast %cst_8 : f32 to vector<1x256xf32>
    %24 = arith.addf %20, %23 : vector<1x256xf32>
    %25 = math.rsqrt %24 : vector<1x256xf32>
    %26 = vector.broadcast %25 : vector<1x256xf32> to vector<16x256xf32>
    %27 = arith.mulf %22, %26 : vector<16x256xf32>
    %cst_9 = arith.constant 0.000000e+00 : f32
    %28 = vector.broadcast %cst_9 : f32 to vector<16x256xf32>
    %29 = arith.maximumf %27, %28 : vector<16x256xf32>
    %30 = vector.broadcast %4 : vector<16x1xf32> to vector<16x256xf32>
    %31 = arith.mulf %29, %30 : vector<16x256xf32>
    %32 = arith.truncf %31 : vector<16x256xf32> to vector<16x256xbf16>
    %c0_10 = arith.constant 0 : index
    %c0_11 = arith.constant 0 : index
    %33 = vector.load %arg4[%c0_10, %c0_11] : memref<256x256xbf16, #tpu.memory_space<vmem>>, vector<256x256xbf16>
    %cst_12 = arith.constant dense<0.000000e+00> : vector<16x256xf32>
    %34 = tpu.matmul %32, %33, %cst_12 {dimension_numbers = #tpu.dot_dimension_numbers<[1], [0], [0], [1], [0, 0, 1, 1], [], []>} : vector<16x256xbf16>, vector<256x256xbf16>, vector<16x256xf32> -> vector<16x256xf32>
    %cst_13 = arith.constant dense<0.000000e+00> : vector<256xf32>
    %35 = vector.multi_reduction <add>, %34, %cst_13 [0] : vector<16x256xf32> to vector<256xf32>
    %36 = vector.shape_cast %35 : vector<256xf32> to vector<1x256xf32>
    %37 = arith.mulf %34, %34 : vector<16x256xf32>
    %cst_14 = arith.constant dense<0.000000e+00> : vector<256xf32>
    %38 = vector.multi_reduction <add>, %37, %cst_14 [0] : vector<16x256xf32> to vector<256xf32>
    %39 = vector.shape_cast %38 : vector<256xf32> to vector<1x256xf32>
    %cst_15 = arith.constant 5.000000e-01 : f32
    %40 = vector.broadcast %cst_15 : f32 to vector<1x256xf32>
    %41 = arith.mulf %36, %40 : vector<1x256xf32>
    %cst_16 = arith.constant 5.000000e-01 : f32
    %42 = vector.broadcast %cst_16 : f32 to vector<1x256xf32>
    %43 = arith.mulf %39, %42 : vector<1x256xf32>
    %44 = arith.mulf %41, %41 : vector<1x256xf32>
    %45 = arith.subf %43, %44 : vector<1x256xf32>
    %cst_17 = arith.constant 0.000000e+00 : f32
    %46 = vector.broadcast %cst_17 : f32 to vector<1x256xf32>
    %47 = arith.maximumf %45, %46 : vector<1x256xf32>
    %48 = vector.broadcast %41 : vector<1x256xf32> to vector<16x256xf32>
    %49 = arith.subf %34, %48 : vector<16x256xf32>
    %cst_18 = arith.constant 9.99999974E-6 : f32
    %50 = vector.broadcast %cst_18 : f32 to vector<1x256xf32>
    %51 = arith.addf %47, %50 : vector<1x256xf32>
    %52 = math.rsqrt %51 : vector<1x256xf32>
    %53 = vector.broadcast %52 : vector<1x256xf32> to vector<16x256xf32>
    %54 = arith.mulf %49, %53 : vector<16x256xf32>
    %cst_19 = arith.constant 0.000000e+00 : f32
    %55 = vector.broadcast %cst_19 : f32 to vector<16x256xf32>
    %56 = arith.maximumf %54, %55 : vector<16x256xf32>
    %57 = vector.broadcast %4 : vector<16x1xf32> to vector<16x256xf32>
    %58 = arith.mulf %56, %57 : vector<16x256xf32>
    %59 = arith.truncf %58 : vector<16x256xf32> to vector<16x256xbf16>
    %c0_20 = arith.constant 0 : index
    %c0_21 = arith.constant 0 : index
    %60 = vector.load %arg5[%c0_20, %c0_21] : memref<256x20xbf16, #tpu.memory_space<vmem>>, vector<256x20xbf16>
    %cst_22 = arith.constant dense<0.000000e+00> : vector<16x20xf32>
    %61 = tpu.matmul %59, %60, %cst_22 {dimension_numbers = #tpu.dot_dimension_numbers<[1], [0], [0], [1], [0, 0, 1, 1], [], []>} : vector<16x256xbf16>, vector<256x20xbf16>, vector<16x20xf32> -> vector<16x20xf32>
    %c0_23 = arith.constant 0 : index
    %c0_24 = arith.constant 0 : index
    %62 = vector.load %arg6[%c0_23, %c0_24] : memref<1x20xf32, #tpu.memory_space<vmem>>, vector<1x20xf32>
    %63 = vector.broadcast %62 : vector<1x20xf32> to vector<16x20xf32>
    %64 = arith.addf %61, %63 : vector<16x20xf32>
    %65 = vector.extract_strided_slice %64 {offsets = [0, 0], sizes = [16, 10], strides = [1, 1]} : vector<16x20xf32> to vector<16x10xf32>
    %66 = vector.extract_strided_slice %64 {offsets = [0, 10], sizes = [16, 10], strides = [1, 1]} : vector<16x20xf32> to vector<16x10xf32>
    %cst_25 = arith.constant 5.000000e-01 : f32
    %67 = vector.broadcast %cst_25 : f32 to vector<16x10xf32>
    %68 = arith.mulf %67, %66 : vector<16x10xf32>
    %69 = math.exp %68 : vector<16x10xf32>
    %c0_26 = arith.constant 0 : index
    %c0_27 = arith.constant 0 : index
    %70 = vector.load %arg2[%c0_26, %c0_27] : memref<16x10xf32, #tpu.memory_space<vmem>>, vector<16x10xf32>
    %71 = arith.mulf %69, %70 : vector<16x10xf32>
    %72 = arith.addf %65, %71 : vector<16x10xf32>
    %73 = vector.broadcast %4 : vector<16x1xf32> to vector<16x10xf32>
    %74 = arith.mulf %72, %73 : vector<16x10xf32>
    %75 = arith.truncf %74 : vector<16x10xf32> to vector<16x10xbf16>
    %c0_28 = arith.constant 0 : index
    %c0_29 = arith.constant 0 : index
    %76 = vector.load %arg7[%c0_28, %c0_29] : memref<10x256xbf16, #tpu.memory_space<vmem>>, vector<10x256xbf16>
    %cst_30 = arith.constant dense<0.000000e+00> : vector<16x256xf32>
    %77 = tpu.matmul %75, %76, %cst_30 {dimension_numbers = #tpu.dot_dimension_numbers<[1], [0], [0], [1], [0, 0, 1, 1], [], []>} : vector<16x10xbf16>, vector<10x256xbf16>, vector<16x256xf32> -> vector<16x256xf32>
    %cst_31 = arith.constant dense<0.000000e+00> : vector<256xf32>
    %78 = vector.multi_reduction <add>, %77, %cst_31 [0] : vector<16x256xf32> to vector<256xf32>
    %79 = vector.shape_cast %78 : vector<256xf32> to vector<1x256xf32>
    %80 = arith.mulf %77, %77 : vector<16x256xf32>
    %cst_32 = arith.constant dense<0.000000e+00> : vector<256xf32>
    %81 = vector.multi_reduction <add>, %80, %cst_32 [0] : vector<16x256xf32> to vector<256xf32>
    %82 = vector.shape_cast %81 : vector<256xf32> to vector<1x256xf32>
    %cst_33 = arith.constant 5.000000e-01 : f32
    %83 = vector.broadcast %cst_33 : f32 to vector<1x256xf32>
    %84 = arith.mulf %79, %83 : vector<1x256xf32>
    %cst_34 = arith.constant 5.000000e-01 : f32
    %85 = vector.broadcast %cst_34 : f32 to vector<1x256xf32>
    %86 = arith.mulf %82, %85 : vector<1x256xf32>
    %87 = arith.mulf %84, %84 : vector<1x256xf32>
    %88 = arith.subf %86, %87 : vector<1x256xf32>
    %cst_35 = arith.constant 0.000000e+00 : f32
    %89 = vector.broadcast %cst_35 : f32 to vector<1x256xf32>
    %90 = arith.maximumf %88, %89 : vector<1x256xf32>
    %91 = vector.broadcast %84 : vector<1x256xf32> to vector<16x256xf32>
    %92 = arith.subf %77, %91 : vector<16x256xf32>
    %cst_36 = arith.constant 9.99999974E-6 : f32
    %93 = vector.broadcast %cst_36 : f32 to vector<1x256xf32>
    %94 = arith.addf %90, %93 : vector<1x256xf32>
    %95 = math.rsqrt %94 : vector<1x256xf32>
    %96 = vector.broadcast %95 : vector<1x256xf32> to vector<16x256xf32>
    %97 = arith.mulf %92, %96 : vector<16x256xf32>
    %cst_37 = arith.constant 0.000000e+00 : f32
    %98 = vector.broadcast %cst_37 : f32 to vector<16x256xf32>
    %99 = arith.maximumf %97, %98 : vector<16x256xf32>
    %100 = vector.broadcast %4 : vector<16x1xf32> to vector<16x256xf32>
    %101 = arith.mulf %99, %100 : vector<16x256xf32>
    %102 = arith.truncf %101 : vector<16x256xf32> to vector<16x256xbf16>
    %c0_38 = arith.constant 0 : index
    %c0_39 = arith.constant 0 : index
    %103 = vector.load %arg8[%c0_38, %c0_39] : memref<256x256xbf16, #tpu.memory_space<vmem>>, vector<256x256xbf16>
    %cst_40 = arith.constant dense<0.000000e+00> : vector<16x256xf32>
    %104 = tpu.matmul %102, %103, %cst_40 {dimension_numbers = #tpu.dot_dimension_numbers<[1], [0], [0], [1], [0, 0, 1, 1], [], []>} : vector<16x256xbf16>, vector<256x256xbf16>, vector<16x256xf32> -> vector<16x256xf32>
    %cst_41 = arith.constant dense<0.000000e+00> : vector<256xf32>
    %105 = vector.multi_reduction <add>, %104, %cst_41 [0] : vector<16x256xf32> to vector<256xf32>
    %106 = vector.shape_cast %105 : vector<256xf32> to vector<1x256xf32>
    %107 = arith.mulf %104, %104 : vector<16x256xf32>
    %cst_42 = arith.constant dense<0.000000e+00> : vector<256xf32>
    %108 = vector.multi_reduction <add>, %107, %cst_42 [0] : vector<16x256xf32> to vector<256xf32>
    %109 = vector.shape_cast %108 : vector<256xf32> to vector<1x256xf32>
    %cst_43 = arith.constant 5.000000e-01 : f32
    %110 = vector.broadcast %cst_43 : f32 to vector<1x256xf32>
    %111 = arith.mulf %106, %110 : vector<1x256xf32>
    %cst_44 = arith.constant 5.000000e-01 : f32
    %112 = vector.broadcast %cst_44 : f32 to vector<1x256xf32>
    %113 = arith.mulf %109, %112 : vector<1x256xf32>
    %114 = arith.mulf %111, %111 : vector<1x256xf32>
    %115 = arith.subf %113, %114 : vector<1x256xf32>
    %cst_45 = arith.constant 0.000000e+00 : f32
    %116 = vector.broadcast %cst_45 : f32 to vector<1x256xf32>
    %117 = arith.maximumf %115, %116 : vector<1x256xf32>
    %118 = vector.broadcast %111 : vector<1x256xf32> to vector<16x256xf32>
    %119 = arith.subf %104, %118 : vector<16x256xf32>
    %cst_46 = arith.constant 9.99999974E-6 : f32
    %120 = vector.broadcast %cst_46 : f32 to vector<1x256xf32>
    %121 = arith.addf %117, %120 : vector<1x256xf32>
    %122 = math.rsqrt %121 : vector<1x256xf32>
    %123 = vector.broadcast %122 : vector<1x256xf32> to vector<16x256xf32>
    %124 = arith.mulf %119, %123 : vector<16x256xf32>
    %cst_47 = arith.constant 0.000000e+00 : f32
    %125 = vector.broadcast %cst_47 : f32 to vector<16x256xf32>
    %126 = arith.maximumf %124, %125 : vector<16x256xf32>
    %127 = vector.broadcast %4 : vector<16x1xf32> to vector<16x256xf32>
    %128 = arith.mulf %126, %127 : vector<16x256xf32>
    %129 = arith.truncf %128 : vector<16x256xf32> to vector<16x256xbf16>
    %c0_48 = arith.constant 0 : index
    %c0_49 = arith.constant 0 : index
    %130 = vector.load %arg9[%c0_48, %c0_49] : memref<256x896xbf16, #tpu.memory_space<vmem>>, vector<256x896xbf16>
    %cst_50 = arith.constant dense<0.000000e+00> : vector<16x896xf32>
    %131 = tpu.matmul %129, %130, %cst_50 {dimension_numbers = #tpu.dot_dimension_numbers<[1], [0], [0], [1], [0, 0, 1, 1], [], []>} : vector<16x256xbf16>, vector<256x896xbf16>, vector<16x896xf32> -> vector<16x896xf32>
    %c0_51 = arith.constant 0 : index
    %c0_52 = arith.constant 0 : index
    %132 = vector.load %arg10[%c0_51, %c0_52] : memref<1x896xf32, #tpu.memory_space<vmem>>, vector<1x896xf32>
    %133 = vector.broadcast %132 : vector<1x896xf32> to vector<16x896xf32>
    %134 = arith.addf %131, %133 : vector<16x896xf32>
    %cst_53 = arith.constant 5.000000e-01 : f32
    %135 = vector.broadcast %cst_53 : f32 to vector<16x896xf32>
    %136 = arith.mulf %135, %134 : vector<16x896xf32>
    %137 = math.tanh %136 : vector<16x896xf32>
    %cst_54 = arith.constant 5.000000e-01 : f32
    %138 = vector.broadcast %cst_54 : f32 to vector<16x896xf32>
    %139 = arith.mulf %138, %137 : vector<16x896xf32>
    %cst_55 = arith.constant 5.000000e-01 : f32
    %140 = vector.broadcast %cst_55 : f32 to vector<16x896xf32>
    %141 = arith.addf %139, %140 : vector<16x896xf32>
    %c0_56 = arith.constant 0 : index
    %c0_57 = arith.constant 0 : index
    %142 = vector.load %arg11[%c0_56, %c0_57] : memref<16x896xf32, #tpu.memory_space<vmem>>, vector<16x896xf32>
    tpu.vector_store %arg11[%c0_56, %c0_57], %141 {strides = array<i32>} : memref<16x896xf32, #tpu.memory_space<vmem>>, vector<16x896xf32>,
    return
  }
  func.func @transform_0(%arg0: i32) -> (i32, i32) {
    %c0_i32 = arith.constant 0 : i32
    %c0_i32_0 = arith.constant 0 : i32
    %c0_i32_1 = arith.constant 0 : i32
    return %c0_i32, %c0_i32_0 : i32, i32
  }
  func.func @transform_1(%arg0: i32) -> (i32, i32) {
    %c0_i32 = arith.constant 0 : i32
    %c0_i32_0 = arith.constant 0 : i32
    %c0_i32_1 = arith.constant 0 : i32
    return %c0_i32, %c0_i32_0 : i32, i32
  }
  func.func @transform_2(%arg0: i32) -> (i32, i32) {
    %c0_i32 = arith.constant 0 : i32
    %c0_i32_0 = arith.constant 0 : i32
    %c0_i32_1 = arith.constant 0 : i32
    return %c0_i32, %c0_i32_0 : i32, i32
  }
  func.func @transform_3(%arg0: i32) -> (i32, i32) {
    %c0_i32 = arith.constant 0 : i32
    %c0_i32_0 = arith.constant 0 : i32
    %c0_i32_1 = arith.constant 0 : i32
    return %c0_i32, %c0_i32_0 : i32, i32
  }
  func.func @transform_4(%arg0: i32) -> (i32, i32) {
    %c0_i32 = arith.constant 0 : i32
    %c0_i32_0 = arith.constant 0 : i32
    %c0_i32_1 = arith.constant 0 : i32
    return %c0_i32, %c0_i32_0 : i32, i32
  }
  func.func @transform_5(%arg0: i32) -> (i32, i32) {
    %c0_i32 = arith.constant 0 : i32
    %c0_i32_0 = arith.constant 0 : i32
    %c0_i32_1 = arith.constant 0 : i32
    return %c0_i32, %c0_i32_0 : i32, i32
  }
  func.func @transform_6(%arg0: i32) -> (i32, i32) {
    %c0_i32 = arith.constant 0 : i32
    %c0_i32_0 = arith.constant 0 : i32
    %c0_i32_1 = arith.constant 0 : i32
    return %c0_i32, %c0_i32_0 : i32, i32
  }
  func.func @transform_7(%arg0: i32) -> (i32, i32) {
    %c0_i32 = arith.constant 0 : i32
    %c0_i32_0 = arith.constant 0 : i32
    %c0_i32_1 = arith.constant 0 : i32
    return %c0_i32, %c0_i32_0 : i32, i32
  }
  func.func @transform_8(%arg0: i32) -> (i32, i32) {
    %c0_i32 = arith.constant 0 : i32
    %c0_i32_0 = arith.constant 0 : i32
    %c0_i32_1 = arith.constant 0 : i32
    return %c0_i32, %c0_i32_0 : i32, i32
  }
  func.func @transform_9(%arg0: i32) -> (i32, i32) {
    %c0_i32 = arith.constant 0 : i32
    %c0_i32_0 = arith.constant 0 : i32
    %c0_i32_1 = arith.constant 0 : i32
    return %c0_i32, %c0_i32_0 : i32, i32
  }
  func.func @transform_10(%arg0: i32) -> (i32, i32) {
    %c0_i32 = arith.constant 0 : i32
    %c0_i32_0 = arith.constant 0 : i32
    %c0_i32_1 = arith.constant 0 : i32
    return %c0_i32, %c0_i32_0 : i32, i32
  }
}

</mosaic_0001>

<llo_original>
// kernel: mlp_model_forward.1
$region0: #{mlp_model_forward.1}
  #allocation0 [shape = 'u32[]', space=smem, size = 0x4, offset = 0x4, fixed_abs, tag = 'smem constant byte address 0x4 - core index']
  #allocation1 [shape = 'u32[72,128]{1,0:T(1,128)}', space=vmem, size = 0x9000, scoped, tag = 'internal scratch']
  %s0 = inlined_call_operand.vmem [shape: bf16[16,896], index: 0, kind: input, shape index: {}]
  %s1 = inlined_call_operand.vmem [shape: f32[16,10], index: 1, kind: input, shape index: {}]
  %s2 = inlined_call_operand.hbm [shape: bf16[896,256], index: 2, kind: input, shape index: {}]
  %s3 = inlined_call_operand.hbm [shape: bf16[256,256], index: 3, kind: input, shape index: {}]
  %s4 = inlined_call_operand.vmem [shape: bf16[256,20], index: 4, kind: input, shape index: {}]
  %s5 = inlined_call_operand.vmem [shape: f32[1,20], index: 5, kind: input, shape index: {}]
  %s6 = inlined_call_operand.vmem [shape: bf16[10,256], index: 6, kind: input, shape index: {}]
  %s7 = inlined_call_operand.hbm [shape: bf16[256,256], index: 7, kind: input, shape index: {}]
  %s8 = inlined_call_operand.hbm [shape: bf16[256,896], index: 8, kind: input, shape index: {}]
  %s9 = inlined_call_operand.vmem [shape: f32[1,896], index: 9, kind: input, shape index: {}]
  %s10 = inlined_call_operand.vmem [shape: f32[16,896], index: 10, kind: output, shape index: {}]
  %s11 = sld [smem:[#allocation0]]
  $region66: #{mlp_model_forward.1} parent=0
    _
  %s13 = ssub.s32 1, %s11
  %s14 = scalar_select 0, %s13, %s11
  $region1: #{mlp_model_forward.1} parent=0
    #allocation2 [shape = 'u8[458752]{0}', space=vmem, size = 0x70000, scoped, tag = 'input window, operand 2, single buffered']
    #allocation3 [shape = 's32[1]{0}', space=sflag, size = 0x4, scoped, tag = 'scoped memory for mlp_model_forward.1']
    #allocation4 [shape = 'u8[131072]{0}', space=vmem, size = 0x20000, scoped, tag = 'input window, operand 3, single buffered']
    #allocation5 [shape = 's32[1]{0}', space=sflag, size = 0x4, scoped, tag = 'scoped memory for mlp_model_forward.1']
    #allocation6 [shape = 'u8[131072]{0}', space=vmem, size = 0x20000, scoped, tag = 'input window, operand 7, single buffered']
    #allocation7 [shape = 'u8[458752]{0}', space=vmem, size = 0x70000, scoped, tag = 'input window, operand 8, single buffered']
    #allocation8 [shape = 's32[1]{0}', space=sflag, size = 0x4, scoped, tag = 'scoped memory for mlp_model_forward.1']
    %15 = vsyncpa [#allocation3], 0
    %16 = vsyncpa [#allocation5], 0
    %17 = vsyncpa [#allocation8], 0
    // Predicated region
    $region2: #{mlp_model_forward.1} parent=1 // pred_check
      _
    $region3: #{mlp_model_forward.1} parent=1 // pred_check_branch
      %19 = sbr.rel (0) target = $region5
    $region4: #{mlp_model_forward.1} parent=1 // pred_region
      _
    $region5: #{mlp_model_forward.1} parent=1 // pred_fallthru
      _
    // Predicated region
    $region6: #{mlp_model_forward.1} parent=1 // pred_check
      _
    $region7: #{mlp_model_forward.1} parent=1 // pred_check_branch
      %21 = sbr.rel (0) target = $region9
    $region8: #{mlp_model_forward.1} parent=1 // pred_region
      _
    $region9: #{mlp_model_forward.1} parent=1 // pred_fallthru
      _
    // Predicated region
    $region10: #{mlp_model_forward.1} parent=1 // pred_check
      _
    $region11: #{mlp_model_forward.1} parent=1 // pred_check_branch
      %23 = sbr.rel (0) target = $region13
    $region12: #{mlp_model_forward.1} parent=1 // pred_region
      %25 = vsyncadd [#allocation3], 0
      %s26 = sshll.u32 %s2, 4
      %s27 = int_to_ptr.hbm [resolvable:$true] %s26
      %s28 = sshll.u32 [#allocation2], 4
      %s29 = int_to_ptr.vmem [resolvable:$true] %s28
      %34 = dma.hbm_to_vmem [thread:$0]  %s27, 14336, %s29, [#allocation3], 128, 128, 8
    $region13: #{mlp_model_forward.1} parent=1 // pred_fallthru
      _
    // Predicated region
    $region14: #{mlp_model_forward.1} parent=1 // pred_check
      _
    $region15: #{mlp_model_forward.1} parent=1 // pred_check_branch
      %36 = sbr.rel (0) target = $region17
    $region16: #{mlp_model_forward.1} parent=1 // pred_region
      %38 = vsyncadd [#allocation5], 0
      %s39 = sshll.u32 %s3, 4
      %s40 = int_to_ptr.hbm [resolvable:$true] %s39
      %s41 = sshll.u32 [#allocation4], 4
      %s42 = int_to_ptr.vmem [resolvable:$true] %s41
      %47 = dma.hbm_to_vmem [thread:$0]  %s40, 4096, %s42, [#allocation5], 128, 128, 8
    $region17: #{mlp_model_forward.1} parent=1 // pred_fallthru
      _
    // Predicated region
    $region18: #{mlp_model_forward.1} parent=1 // pred_check
      _
    $region19: #{mlp_model_forward.1} parent=1 // pred_check_branch
      %49 = sbr.rel (0) target = $region21
    $region20: #{mlp_model_forward.1} parent=1 // pred_region
      _
    $region21: #{mlp_model_forward.1} parent=1 // pred_fallthru
      _
    // Predicated region
    $region22: #{mlp_model_forward.1} parent=1 // pred_check
      _
    $region23: #{mlp_model_forward.1} parent=1 // pred_check_branch
      %51 = sbr.rel (0) target = $region25
    $region24: #{mlp_model_forward.1} parent=1 // pred_region
      _
    $region25: #{mlp_model_forward.1} parent=1 // pred_fallthru
      _
    // Predicated region
    $region26: #{mlp_model_forward.1} parent=1 // pred_check
      _
    $region27: #{mlp_model_forward.1} parent=1 // pred_check_branch
      %53 = sbr.rel (0) target = $region29
    $region28: #{mlp_model_forward.1} parent=1 // pred_region
      _
    $region29: #{mlp_model_forward.1} parent=1 // pred_fallthru
      _
    // Predicated region
    $region30: #{mlp_model_forward.1} parent=1 // pred_check
      _
    $region31: #{mlp_model_forward.1} parent=1 // pred_check_branch
      %55 = sbr.rel (0) target = $region33
    $region32: #{mlp_model_forward.1} parent=1 // pred_region
      %57 = vsyncadd [#allocation5], 0
      %s58 = sshll.u32 %s7, 4
      %s59 = int_to_ptr.hbm [resolvable:$true] %s58
      %s60 = sshll.u32 [#allocation6], 4
      %s61 = int_to_ptr.vmem [resolvable:$true] %s60
      %66 = dma.hbm_to_vmem [thread:$0]  %s59, 4096, %s61, [#allocation5], 128, 128, 8
    $region33: #{mlp_model_forward.1} parent=1 // pred_fallthru
      _
    // Predicated region
    $region34: #{mlp_model_forward.1} parent=1 // pred_check
      _
    $region35: #{mlp_model_forward.1} parent=1 // pred_check_branch
      %68 = sbr.rel (0) target = $region37
    $region36: #{mlp_model_forward.1} parent=1 // pred_region
      %70 = vsyncadd [#allocation8], 0
      %s71 = sshll.u32 %s8, 4
      %s72 = int_to_ptr.hbm [resolvable:$true] %s71
      %s73 = sshll.u32 [#allocation7], 4
      %s74 = int_to_ptr.vmem [resolvable:$true] %s73
      %79 = dma.hbm_to_vmem [thread:$0]  %s72, 14336, %s74, [#allocation8], 448, 448, 28
    $region37: #{mlp_model_forward.1} parent=1 // pred_fallthru
      _
    // Predicated region
    $region38: #{mlp_model_forward.1} parent=1 // pred_check
      _
    $region39: #{mlp_model_forward.1} parent=1 // pred_check_branch
      %81 = sbr.rel (0) target = $region41
    $region40: #{mlp_model_forward.1} parent=1 // pred_region
      _
    $region41: #{mlp_model_forward.1} parent=1 // pred_fallthru
      _
    // Predicated region
    $region42: #{mlp_model_forward.1} parent=1 // pred_check
      _
    $region43: #{mlp_model_forward.1} parent=1 // pred_check_branch
      %83 = sbr.rel (0) target = $region45
    $region44: #{mlp_model_forward.1} parent=1 // pred_region
      %85 = dma.done [#allocation3], 14336
    $region45: #{mlp_model_forward.1} parent=1 // pred_fallthru
      _
    // Predicated region
    $region46: #{mlp_model_forward.1} parent=1 // pred_check
      _
    $region47: #{mlp_model_forward.1} parent=1 // pred_check_branch
      %87 = sbr.rel (0) target = $region49
    $region48: #{mlp_model_forward.1} parent=1 // pred_region
      %89 = dma.done [#allocation5], 4096
    $region49: #{mlp_model_forward.1} parent=1 // pred_fallthru
      _
    // Predicated region
    $region50: #{mlp_model_forward.1} parent=1 // pred_check
      _
    $region51: #{mlp_model_forward.1} parent=1 // pred_check_branch
      %91 = sbr.rel (0) target = $region53
    $region52: #{mlp_model_forward.1} parent=1 // pred_region
      %93 = dma.done [#allocation5], 4096
    $region53: #{mlp_model_forward.1} parent=1 // pred_fallthru
      _
    // Predicated region
    $region54: #{mlp_model_forward.1} parent=1 // pred_check
      _
    $region55: #{mlp_model_forward.1} parent=1 // pred_check_branch
      %95 = sbr.rel (0) target = $region57
    $region56: #{mlp_model_forward.1} parent=1 // pred_region
      %97 = dma.done [#allocation8], 14336
    $region57: #{mlp_model_forward.1} parent=1 // pred_fallthru
      _
    %v99 = vlaneseq
    %v100 = vshrl.u32 %v99, 7
    %v101 = vadd.s32 %v100, 8
    %vm102 = vcmp.lt.s32.totalorder %v100, 2
    %vm103 = vcmp.lt.s32.totalorder %v101, 2
    %v104 = vsel %vm102, 1, 0
    %v105 = vsel %vm103, 1, 0
    %v106 = vcvt.s32.f32 %v104
    %v107 = vcvt.s32.f32 %v105
    %v108 = vld [vmem:[%s0] sm:$0xff]
    %v109 = vld [vmem:[%s0 + $0x8] sm:$0xff]
    %v110 = vld [vmem:[%s0 + $0x10] sm:$0xff]
    %v111 = vld [vmem:[%s0 + $0x18] sm:$0xf]
    %v112 = vld [vmem:[%s0 + $0x1c] sm:$0xff]
    %v113 = vld [vmem:[%s0 + $0x24] sm:$0xff]
    %v114 = vld [vmem:[%s0 + $0x2c] sm:$0xff]
    %v115 = vld [vmem:[%s0 + $0x34] sm:$0xf]
    %v116 = vld [vmem:[#allocation2] sm:$0xff]
    %v117 = vld [vmem:[#allocation2 + $0x8] sm:$0xff]
    %v118 = vld [vmem:[#allocation2 + $0x10] sm:$0xff]
    %v119 = vld [vmem:[#allocation2 + $0x18] sm:$0xff]
    %v120 = vld [vmem:[#allocation2 + $0x20] sm:$0xff]
    %v121 = vld [vmem:[#allocation2 + $0x28] sm:$0xff]
    %v122 = vld [vmem:[#allocation2 + $0x30] sm:$0xff]
    %v123 = vld [vmem:[#allocation2 + $0x38] sm:$0xff]
    %v124 = vld [vmem:[#allocation2 + $0x40] sm:$0xff]
    %v125 = vld [vmem:[#allocation2 + $0x48] sm:$0xff]
    %v126 = vld [vmem:[#allocation2 + $0x50] sm:$0xff]
    %v127 = vld [vmem:[#allocation2 + $0x58] sm:$0xff]
    %v128 = vld [vmem:[#allocation2 + $0x60] sm:$0xff]
    %v129 = vld [vmem:[#allocation2 + $0x68] sm:$0xff]
    %v130 = vld [vmem:[#allocation2 + $0x70] sm:$0xff]
    %v131 = vld [vmem:[#allocation2 + $0x78] sm:$0xff]
    %v132 = vld [vmem:[#allocation2 + $0x80] sm:$0xff]
    %v133 = vld [vmem:[#allocation2 + $0x88] sm:$0xff]
    %v134 = vld [vmem:[#allocation2 + $0x90] sm:$0xff]
    %v135 = vld [vmem:[#allocation2 + $0x98] sm:$0xff]
    %v136 = vld [vmem:[#allocation2 + $0xa0] sm:$0xff]
    %v137 = vld [vmem:[#allocation2 + $0xa8] sm:$0xff]
    %v138 = vld [vmem:[#allocation2 + $0xb0] sm:$0xff]
    %v139 = vld [vmem:[#allocation2 + $0xb8] sm:$0xff]
    %v140 = vld [vmem:[#allocation2 + $0xc0] sm:$0xff]
    %v141 = vld [vmem:[#allocation2 + $0xc8] sm:$0xff]
    %v142 = vld [vmem:[#allocation2 + $0xd0] sm:$0xff]
    %v143 = vld [vmem:[#allocation2 + $0xd8] sm:$0xff]
    %v144 = vld [vmem:[#allocation2 + $0xe0] sm:$0xff]
    %v145 = vld [vmem:[#allocation2 + $0xe8] sm:$0xff]
    %v146 = vld [vmem:[#allocation2 + $0xf0] sm:$0xff]
    %v147 = vld [vmem:[#allocation2 + $0xf8] sm:$0xff]
    %v148 = vld [vmem:[#allocation2 + $0x100] sm:$0xff]
    %v149 = vld [vmem:[#allocation2 + $0x108] sm:$0xff]
    %v150 = vld [vmem:[#allocation2 + $0x110] sm:$0xff]
    %v151 = vld [vmem:[#allocation2 + $0x118] sm:$0xff]
    %v152 = vld [vmem:[#allocation2 + $0x120] sm:$0xff]
    %v153 = vld [vmem:[#allocation2 + $0x128] sm:$0xff]
    %v154 = vld [vmem:[#allocation2 + $0x130] sm:$0xff]
    %v155 = vld [vmem:[#allocation2 + $0x138] sm:$0xff]
    %v156 = vld [vmem:[#allocation2 + $0x140] sm:$0xff]
    %v157 = vld [vmem:[#allocation2 + $0x148] sm:$0xff]
    %v158 = vld [vmem:[#allocation2 + $0x150] sm:$0xff]
    %v159 = vld [vmem:[#allocation2 + $0x158] sm:$0xff]
    %v160 = vld [vmem:[#allocation2 + $0x160] sm:$0xff]
    %v161 = vld [vmem:[#allocation2 + $0x168] sm:$0xff]
    %v162 = vld [vmem:[#allocation2 + $0x170] sm:$0xff]
    %v163 = vld [vmem:[#allocation2 + $0x178] sm:$0xff]
    %v164 = vld [vmem:[#allocation2 + $0x180] sm:$0xff]
    %v165 = vld [vmem:[#allocation2 + $0x188] sm:$0xff]
    %v166 = vld [vmem:[#allocation2 + $0x190] sm:$0xff]
    %v167 = vld [vmem:[#allocation2 + $0x198] sm:$0xff]
    %v168 = vld [vmem:[#allocation2 + $0x1a0] sm:$0xff]
    %v169 = vld [vmem:[#allocation2 + $0x1a8] sm:$0xff]
    %v170 = vld [vmem:[#allocation2 + $0x1b0] sm:$0xff]
    %v171 = vld [vmem:[#allocation2 + $0x1b8] sm:$0xff]
    %v172 = vld [vmem:[#allocation2 + $0x1c0] sm:$0xff]
    %v173 = vld [vmem:[#allocation2 + $0x1c8] sm:$0xff]
    %v174 = vld [vmem:[#allocation2 + $0x1d0] sm:$0xff]
    %v175 = vld [vmem:[#allocation2 + $0x1d8] sm:$0xff]
    %v176 = vld [vmem:[#allocation2 + $0x1e0] sm:$0xff]
    %v177 = vld [vmem:[#allocation2 + $0x1e8] sm:$0xff]
    %v178 = vld [vmem:[#allocation2 + $0x1f0] sm:$0xff]
    %v179 = vld [vmem:[#allocation2 + $0x1f8] sm:$0xff]
    %v180 = vld [vmem:[#allocation2 + $0x200] sm:$0xff]
    %v181 = vld [vmem:[#allocation2 + $0x208] sm:$0xff]
    %v182 = vld [vmem:[#allocation2 + $0x210] sm:$0xff]
    %v183 = vld [vmem:[#allocation2 + $0x218] sm:$0xff]
    %v184 = vld [vmem:[#allocation2 + $0x220] sm:$0xff]
    %v185 = vld [vmem:[#allocation2 + $0x228] sm:$0xff]
    %v186 = vld [vmem:[#allocation2 + $0x230] sm:$0xff]
    %v187 = vld [vmem:[#allocation2 + $0x238] sm:$0xff]
    %v188 = vld [vmem:[#allocation2 + $0x240] sm:$0xff]
    %v189 = vld [vmem:[#allocation2 + $0x248] sm:$0xff]
    %v190 = vld [vmem:[#allocation2 + $0x250] sm:$0xff]
    %v191 = vld [vmem:[#allocation2 + $0x258] sm:$0xff]
    %v192 = vld [vmem:[#allocation2 + $0x260] sm:$0xff]
    %v193 = vld [vmem:[#allocation2 + $0x268] sm:$0xff]
    %v194 = vld [vmem:[#allocation2 + $0x270] sm:$0xff]
    %v195 = vld [vmem:[#allocation2 + $0x278] sm:$0xff]
    %v196 = vld [vmem:[#allocation2 + $0x280] sm:$0xff]
    %v197 = vld [vmem:[#allocation2 + $0x288] sm:$0xff]
    %v198 = vld [vmem:[#allocation2 + $0x290] sm:$0xff]
    %v199 = vld [vmem:[#allocation2 + $0x298] sm:$0xff]
    %v200 = vld [vmem:[#allocation2 + $0x2a0] sm:$0xff]
    %v201 = vld [vmem:[#allocation2 + $0x2a8] sm:$0xff]
    %v202 = vld [vmem:[#allocation2 + $0x2b0] sm:$0xff]
    %v203 = vld [vmem:[#allocation2 + $0x2b8] sm:$0xff]
    %v204 = vld [vmem:[#allocation2 + $0x2c0] sm:$0xff]
    %v205 = vld [vmem:[#allocation2 + $0x2c8] sm:$0xff]
    %v206 = vld [vmem:[#allocation2 + $0x2d0] sm:$0xff]
    %v207 = vld [vmem:[#allocation2 + $0x2d8] sm:$0xff]
    %v208 = vld [vmem:[#allocation2 + $0x2e0] sm:$0xff]
    %v209 = vld [vmem:[#allocation2 + $0x2e8] sm:$0xff]
    %v210 = vld [vmem:[#allocation2 + $0x2f0] sm:$0xff]
    %v211 = vld [vmem:[#allocation2 + $0x2f8] sm:$0xff]
    %v212 = vld [vmem:[#allocation2 + $0x300] sm:$0xff]
    %v213 = vld [vmem:[#allocation2 + $0x308] sm:$0xff]
    %v214 = vld [vmem:[#allocation2 + $0x310] sm:$0xff]
    %v215 = vld [vmem:[#allocation2 + $0x318] sm:$0xff]
    %v216 = vld [vmem:[#allocation2 + $0x320] sm:$0xff]
    %v217 = vld [vmem:[#allocation2 + $0x328] sm:$0xff]
    %v218 = vld [vmem:[#allocation2 + $0x330] sm:$0xff]
    %v219 = vld [vmem:[#allocation2 + $0x338] sm:$0xff]
    %v220 = vld [vmem:[#allocation2 + $0x340] sm:$0xff]
    %v221 = vld [vmem:[#allocation2 + $0x348] sm:$0xff]
    %v222 = vld [vmem:[#allocation2 + $0x350] sm:$0xff]
    %v223 = vld [vmem:[#allocation2 + $0x358] sm:$0xff]
    %v224 = vld [vmem:[#allocation2 + $0x360] sm:$0xff]
    %v225 = vld [vmem:[#allocation2 + $0x368] sm:$0xff]
    %v226 = vld [vmem:[#allocation2 + $0x370] sm:$0xff]
    %v227 = vld [vmem:[#allocation2 + $0x378] sm:$0xff]
    %v236 = vunpack.c.l.b16 %v108
    %v237 = vunpack.c.h.b16 %v108
    %v238 = vunpack.c.l.b16 %v109
    %v239 = vunpack.c.h.b16 %v109
    %v240 = vunpack.c.l.b16 %v110
    %v241 = vunpack.c.h.b16 %v110
    %v242 = vunpack.c.l.b16 %v111
    %v243 = vunpack.c.l.b16 %v112
    %v244 = vunpack.c.h.b16 %v112
    %v245 = vunpack.c.l.b16 %v113
    %v246 = vunpack.c.h.b16 %v113
    %v247 = vunpack.c.l.b16 %v114
    %v248 = vunpack.c.h.b16 %v114
    %v249 = vunpack.c.l.b16 %v115
    %v250 = vpack.c.b16 %v243, %v236
    %v251 = vpack.c.b16 %v244, %v237
    %v252 = vpack.c.b16 %v245, %v238
    %v253 = vpack.c.b16 %v246, %v239
    %v254 = vpack.c.b16 %v247, %v240
    %v255 = vpack.c.b16 %v248, %v241
    %v256 = vpack.c.b16 %v249, %v242
    %v376 = vunpack.c.l.b16 %v116
    %v377 = vunpack.c.h.b16 %v116
    %v378 = vunpack.c.l.b16 %v117
    %v379 = vunpack.c.h.b16 %v117
    %v380 = vunpack.c.l.b16 %v118
    %v381 = vunpack.c.h.b16 %v118
    %v382 = vunpack.c.l.b16 %v119
    %v383 = vunpack.c.h.b16 %v119
    %v384 = vunpack.c.l.b16 %v120
    %v385 = vunpack.c.h.b16 %v120
    %v386 = vunpack.c.l.b16 %v121
    %v387 = vunpack.c.h.b16 %v121
    %v388 = vunpack.c.l.b16 %v122
    %v389 = vunpack.c.h.b16 %v122
    %v390 = vunpack.c.l.b16 %v123
    %v391 = vunpack.c.h.b16 %v123
    %v392 = vunpack.c.l.b16 %v124
    %v393 = vunpack.c.h.b16 %v124
    %v394 = vunpack.c.l.b16 %v125
    %v395 = vunpack.c.h.b16 %v125
    %v396 = vunpack.c.l.b16 %v126
    %v397 = vunpack.c.h.b16 %v126
    %v398 = vunpack.c.l.b16 %v127
    %v399 = vunpack.c.h.b16 %v127
    %v400 = vunpack.c.l.b16 %v128
    %v401 = vunpack.c.h.b16 %v128
    %v402 = vunpack.c.l.b16 %v129
    %v403 = vunpack.c.h.b16 %v129
    %v404 = vunpack.c.l.b16 %v130
    %v405 = vunpack.c.h.b16 %v130
    %v406 = vunpack.c.l.b16 %v131
    %v407 = vunpack.c.h.b16 %v131
    %v408 = vunpack.c.l.b16 %v132
    %v409 = vunpack.c.h.b16 %v132
    %v410 = vunpack.c.l.b16 %v133
    %v411 = vunpack.c.h.b16 %v133
    %v412 = vunpack.c.l.b16 %v134
    %v413 = vunpack.c.h.b16 %v134
    %v414 = vunpack.c.l.b16 %v135
    %v415 = vunpack.c.h.b16 %v135
    %v416 = vunpack.c.l.b16 %v136
    %v417 = vunpack.c.h.b16 %v136
    %v418 = vunpack.c.l.b16 %v137
    %v419 = vunpack.c.h.b16 %v137
    %v420 = vunpack.c.l.b16 %v138
    %v421 = vunpack.c.h.b16 %v138
    %v422 = vunpack.c.l.b16 %v139
    %v423 = vunpack.c.h.b16 %v139
    %v424 = vunpack.c.l.b16 %v140
    %v425 = vunpack.c.h.b16 %v140
    %v426 = vunpack.c.l.b16 %v141
    %v427 = vunpack.c.h.b16 %v141
    %v428 = vunpack.c.l.b16 %v142
    %v429 = vunpack.c.h.b16 %v142
    %v430 = vunpack.c.l.b16 %v143
    %v431 = vunpack.c.h.b16 %v143
    %v432 = vunpack.c.l.b16 %v144
    %v433 = vunpack.c.h.b16 %v144
    %v434 = vunpack.c.l.b16 %v145
    %v435 = vunpack.c.h.b16 %v145
    %v436 = vunpack.c.l.b16 %v146
    %v437 = vunpack.c.h.b16 %v146
    %v438 = vunpack.c.l.b16 %v147
    %v439 = vunpack.c.h.b16 %v147
    %v440 = vunpack.c.l.b16 %v148
    %v441 = vunpack.c.h.b16 %v148
    %v442 = vunpack.c.l.b16 %v149
    %v443 = vunpack.c.h.b16 %v149
    %v444 = vunpack.c.l.b16 %v150
    %v445 = vunpack.c.h.b16 %v150
    %v446 = vunpack.c.l.b16 %v151
    %v447 = vunpack.c.h.b16 %v151
    %v448 = vunpack.c.l.b16 %v152
    %v449 = vunpack.c.h.b16 %v152
    %v450 = vunpack.c.l.b16 %v153
    %v451 = vunpack.c.h.b16 %v153
    %v452 = vunpack.c.l.b16 %v154
    %v453 = vunpack.c.h.b16 %v154
    %v454 = vunpack.c.l.b16 %v155
    %v455 = vunpack.c.h.b16 %v155
    %v456 = vunpack.c.l.b16 %v156
    %v457 = vunpack.c.h.b16 %v156
    %v458 = vunpack.c.l.b16 %v157
    %v459 = vunpack.c.h.b16 %v157
    %v460 = vunpack.c.l.b16 %v158
    %v461 = vunpack.c.h.b16 %v158
    %v462 = vunpack.c.l.b16 %v159
    %v463 = vunpack.c.h.b16 %v159
    %v464 = vunpack.c.l.b16 %v160
    %v465 = vunpack.c.h.b16 %v160
    %v466 = vunpack.c.l.b16 %v161
    %v467 = vunpack.c.h.b16 %v161
    %v468 = vunpack.c.l.b16 %v162
    %v469 = vunpack.c.h.b16 %v162
    %v470 = vunpack.c.l.b16 %v163
    %v471 = vunpack.c.h.b16 %v163
    %v472 = vunpack.c.l.b16 %v164
    %v473 = vunpack.c.h.b16 %v164
    %v474 = vunpack.c.l.b16 %v165
    %v475 = vunpack.c.h.b16 %v165
    %v476 = vunpack.c.l.b16 %v166
    %v477 = vunpack.c.h.b16 %v166
    %v478 = vunpack.c.l.b16 %v167
    %v479 = vunpack.c.h.b16 %v167
    %v480 = vunpack.c.l.b16 %v168
    %v481 = vunpack.c.h.b16 %v168
    %v482 = vunpack.c.l.b16 %v169
    %v483 = vunpack.c.h.b16 %v169
    %v484 = vunpack.c.l.b16 %v170
    %v485 = vunpack.c.h.b16 %v170
    %v486 = vunpack.c.l.b16 %v171
    %v487 = vunpack.c.h.b16 %v171
    %v488 = vunpack.c.l.b16 %v172
    %v489 = vunpack.c.h.b16 %v172
    %v490 = vunpack.c.l.b16 %v173
    %v491 = vunpack.c.h.b16 %v173
    %v492 = vunpack.c.l.b16 %v174
    %v493 = vunpack.c.h.b16 %v174
    %v494 = vunpack.c.l.b16 %v175
    %v495 = vunpack.c.h.b16 %v175
    %v496 = vunpack.c.l.b16 %v176
    %v497 = vunpack.c.h.b16 %v176
    %v498 = vunpack.c.l.b16 %v177
    %v499 = vunpack.c.h.b16 %v177
    %v500 = vunpack.c.l.b16 %v178
    %v501 = vunpack.c.h.b16 %v178
    %v502 = vunpack.c.l.b16 %v179
    %v503 = vunpack.c.h.b16 %v179
    %v504 = vunpack.c.l.b16 %v180
    %v505 = vunpack.c.h.b16 %v180
    %v506 = vunpack.c.l.b16 %v181
    %v507 = vunpack.c.h.b16 %v181
    %v508 = vunpack.c.l.b16 %v182
    %v509 = vunpack.c.h.b16 %v182
    %v510 = vunpack.c.l.b16 %v183
    %v511 = vunpack.c.h.b16 %v183
    %v512 = vunpack.c.l.b16 %v184
    %v513 = vunpack.c.h.b16 %v184
    %v514 = vunpack.c.l.b16 %v185
    %v515 = vunpack.c.h.b16 %v185
    %v516 = vunpack.c.l.b16 %v186
    %v517 = vunpack.c.h.b16 %v186
    %v518 = vunpack.c.l.b16 %v187
    %v519 = vunpack.c.h.b16 %v187
    %v520 = vunpack.c.l.b16 %v188
    %v521 = vunpack.c.h.b16 %v188
    %v522 = vunpack.c.l.b16 %v189
    %v523 = vunpack.c.h.b16 %v189
    %v524 = vunpack.c.l.b16 %v190
    %v525 = vunpack.c.h.b16 %v190
    %v526 = vunpack.c.l.b16 %v191
    %v527 = vunpack.c.h.b16 %v191
    %v528 = vunpack.c.l.b16 %v192
    %v529 = vunpack.c.h.b16 %v192
    %v530 = vunpack.c.l.b16 %v193
    %v531 = vunpack.c.h.b16 %v193
    %v532 = vunpack.c.l.b16 %v194
    %v533 = vunpack.c.h.b16 %v194
    %v534 = vunpack.c.l.b16 %v195
    %v535 = vunpack.c.h.b16 %v195
    %v536 = vunpack.c.l.b16 %v196
    %v537 = vunpack.c.h.b16 %v196
    %v538 = vunpack.c.l.b16 %v197
    %v539 = vunpack.c.h.b16 %v197
    %v540 = vunpack.c.l.b16 %v198
    %v541 = vunpack.c.h.b16 %v198
    %v542 = vunpack.c.l.b16 %v199
    %v543 = vunpack.c.h.b16 %v199
    %v544 = vunpack.c.l.b16 %v200
    %v545 = vunpack.c.h.b16 %v200
    %v546 = vunpack.c.l.b16 %v201
    %v547 = vunpack.c.h.b16 %v201
    %v548 = vunpack.c.l.b16 %v202
    %v549 = vunpack.c.h.b16 %v202
    %v550 = vunpack.c.l.b16 %v203
    %v551 = vunpack.c.h.b16 %v203
    %v552 = vunpack.c.l.b16 %v204
    %v553 = vunpack.c.h.b16 %v204
    %v554 = vunpack.c.l.b16 %v205
    %v555 = vunpack.c.h.b16 %v205
    %v556 = vunpack.c.l.b16 %v206
    %v557 = vunpack.c.h.b16 %v206
    %v558 = vunpack.c.l.b16 %v207
    %v559 = vunpack.c.h.b16 %v207
    %v560 = vunpack.c.l.b16 %v208
    %v561 = vunpack.c.h.b16 %v208
    %v562 = vunpack.c.l.b16 %v209
    %v563 = vunpack.c.h.b16 %v209
    %v564 = vunpack.c.l.b16 %v210
    %v565 = vunpack.c.h.b16 %v210
    %v566 = vunpack.c.l.b16 %v211
    %v567 = vunpack.c.h.b16 %v211
    %v568 = vunpack.c.l.b16 %v212
    %v569 = vunpack.c.h.b16 %v212
    %v570 = vunpack.c.l.b16 %v213
    %v571 = vunpack.c.h.b16 %v213
    %v572 = vunpack.c.l.b16 %v214
    %v573 = vunpack.c.h.b16 %v214
    %v574 = vunpack.c.l.b16 %v215
    %v575 = vunpack.c.h.b16 %v215
    %v576 = vunpack.c.l.b16 %v216
    %v577 = vunpack.c.h.b16 %v216
    %v578 = vunpack.c.l.b16 %v217
    %v579 = vunpack.c.h.b16 %v217
    %v580 = vunpack.c.l.b16 %v218
    %v581 = vunpack.c.h.b16 %v218
    %v582 = vunpack.c.l.b16 %v219
    %v583 = vunpack.c.h.b16 %v219
    %v584 = vunpack.c.l.b16 %v220
    %v585 = vunpack.c.h.b16 %v220
    %v586 = vunpack.c.l.b16 %v221
    %v587 = vunpack.c.h.b16 %v221
    %v588 = vunpack.c.l.b16 %v222
    %v589 = vunpack.c.h.b16 %v222
    %v590 = vunpack.c.l.b16 %v223
    %v591 = vunpack.c.h.b16 %v223
    %v592 = vunpack.c.l.b16 %v224
    %v593 = vunpack.c.h.b16 %v224
    %v594 = vunpack.c.l.b16 %v225
    %v595 = vunpack.c.h.b16 %v225
    %v596 = vunpack.c.l.b16 %v226
    %v597 = vunpack.c.h.b16 %v226
    %v598 = vunpack.c.l.b16 %v227
    %v599 = vunpack.c.h.b16 %v227
    %v600 = vpack.c.b16 %v378, %v376
    %v601 = vpack.c.b16 %v379, %v377
    %v602 = vpack.c.b16 %v382, %v380
    %v603 = vpack.c.b16 %v383, %v381
    %v604 = vpack.c.b16 %v386, %v384
    %v605 = vpack.c.b16 %v387, %v385
    %v606 = vpack.c.b16 %v390, %v388
    %v607 = vpack.c.b16 %v391, %v389
    %v608 = vpack.c.b16 %v394, %v392
    %v609 = vpack.c.b16 %v395, %v393
    %v610 = vpack.c.b16 %v398, %v396
    %v611 = vpack.c.b16 %v399, %v397
    %v612 = vpack.c.b16 %v402, %v400
    %v613 = vpack.c.b16 %v403, %v401
    %v614 = vpack.c.b16 %v406, %v404
    %v615 = vpack.c.b16 %v407, %v405
    %v616 = vpack.c.b16 %v410, %v408
    %v617 = vpack.c.b16 %v411, %v409
    %v618 = vpack.c.b16 %v414, %v412
    %v619 = vpack.c.b16 %v415, %v413
    %v620 = vpack.c.b16 %v418, %v416
    %v621 = vpack.c.b16 %v419, %v417
    %v622 = vpack.c.b16 %v422, %v420
    %v623 = vpack.c.b16 %v423, %v421
    %v624 = vpack.c.b16 %v426, %v424
    %v625 = vpack.c.b16 %v427, %v425
    %v626 = vpack.c.b16 %v430, %v428
    %v627 = vpack.c.b16 %v431, %v429
    %v628 = vpack.c.b16 %v434, %v432
    %v629 = vpack.c.b16 %v435, %v433
    %v630 = vpack.c.b16 %v438, %v436
    %v631 = vpack.c.b16 %v439, %v437
    %v632 = vpack.c.b16 %v442, %v440
    %v633 = vpack.c.b16 %v443, %v441
    %v634 = vpack.c.b16 %v446, %v444
    %v635 = vpack.c.b16 %v447, %v445
    %v636 = vpack.c.b16 %v450, %v448
    %v637 = vpack.c.b16 %v451, %v449
    %v638 = vpack.c.b16 %v454, %v452
    %v639 = vpack.c.b16 %v455, %v453
    %v640 = vpack.c.b16 %v458, %v456
    %v641 = vpack.c.b16 %v459, %v457
    %v642 = vpack.c.b16 %v462, %v460
    %v643 = vpack.c.b16 %v463, %v461
    %v644 = vpack.c.b16 %v466, %v464
    %v645 = vpack.c.b16 %v467, %v465
    %v646 = vpack.c.b16 %v470, %v468
    %v647 = vpack.c.b16 %v471, %v469
    %v648 = vpack.c.b16 %v474, %v472
    %v649 = vpack.c.b16 %v475, %v473
    %v650 = vpack.c.b16 %v478, %v476
    %v651 = vpack.c.b16 %v479, %v477
    %v652 = vpack.c.b16 %v482, %v480
    %v653 = vpack.c.b16 %v483, %v481
    %v654 = vpack.c.b16 %v486, %v484
    %v655 = vpack.c.b16 %v487, %v485
    %v656 = vpack.c.b16 %v490, %v488
    %v657 = vpack.c.b16 %v491, %v489
    %v658 = vpack.c.b16 %v494, %v492
    %v659 = vpack.c.b16 %v495, %v493
    %v660 = vpack.c.b16 %v498, %v496
    %v661 = vpack.c.b16 %v499, %v497
    %v662 = vpack.c.b16 %v502, %v500
    %v663 = vpack.c.b16 %v503, %v501
    %v664 = vpack.c.b16 %v506, %v504
    %v665 = vpack.c.b16 %v507, %v505
    %v666 = vpack.c.b16 %v510, %v508
    %v667 = vpack.c.b16 %v511, %v509
    %v668 = vpack.c.b16 %v514, %v512
    %v669 = vpack.c.b16 %v515, %v513
    %v670 = vpack.c.b16 %v518, %v516
    %v671 = vpack.c.b16 %v519, %v517
    %v672 = vpack.c.b16 %v522, %v520
    %v673 = vpack.c.b16 %v523, %v521
    %v674 = vpack.c.b16 %v526, %v524
    %v675 = vpack.c.b16 %v527, %v525
    %v676 = vpack.c.b16 %v530, %v528
    %v677 = vpack.c.b16 %v531, %v529
    %v678 = vpack.c.b16 %v534, %v532
    %v679 = vpack.c.b16 %v535, %v533
    %v680 = vpack.c.b16 %v538, %v536
    %v681 = vpack.c.b16 %v539, %v537
    %v682 = vpack.c.b16 %v542, %v540
    %v683 = vpack.c.b16 %v543, %v541
    %v684 = vpack.c.b16 %v546, %v544
    %v685 = vpack.c.b16 %v547, %v545
    %v686 = vpack.c.b16 %v550, %v548
    %v687 = vpack.c.b16 %v551, %v549
    %v688 = vpack.c.b16 %v554, %v552
    %v689 = vpack.c.b16 %v555, %v553
    %v690 = vpack.c.b16 %v558, %v556
    %v691 = vpack.c.b16 %v559, %v557
    %v692 = vpack.c.b16 %v562, %v560
    %v693 = vpack.c.b16 %v563, %v561
    %v694 = vpack.c.b16 %v566, %v564
    %v695 = vpack.c.b16 %v567, %v565
    %v696 = vpack.c.b16 %v570, %v568
    %v697 = vpack.c.b16 %v571, %v569
    %v698 = vpack.c.b16 %v574, %v572
    %v699 = vpack.c.b16 %v575, %v573
    %v700 = vpack.c.b16 %v578, %v576
    %v701 = vpack.c.b16 %v579, %v577
    %v702 = vpack.c.b16 %v582, %v580
    %v703 = vpack.c.b16 %v583, %v581
    %v704 = vpack.c.b16 %v586, %v584
    %v705 = vpack.c.b16 %v587, %v585
    %v706 = vpack.c.b16 %v590, %v588
    %v707 = vpack.c.b16 %v591, %v589
    %v708 = vpack.c.b16 %v594, %v592
    %v709 = vpack.c.b16 %v595, %v593
    %v710 = vpack.c.b16 %v598, %v596
    %v711 = vpack.c.b16 %v599, %v597
    %824 = vmatpush.bf16.msra.mxu0 %v614
    %825 = vmatpush.bf16.msra.mxu0 %v612
    %826 = vmatpush.bf16.msra.mxu0 %v610
    %827 = vmatpush.bf16.msra.mxu0 %v608
    %828 = vmatpush.bf16.msra.mxu0 %v606
    %829 = vmatpush.bf16.msra.mxu0 %v604
    %830 = vmatpush.bf16.msra.mxu0 %v602
    %831 = vmatpush.bf16.msra.mxu0 %v600
    %832 = vmatmul.bf16.gmra.mxu0 %v250
    %v833 = vpop.f32.mrf.mxu0
    %v834 = vadd.f32 0.0, %v833
    %v835 = vpop.f32.mrf.mxu0
    %v836 = vadd.f32 0.0, %v835
    %837 = vdwg.mxu0
    %838 = vmatpush.bf16.msra.mxu0 %v630
    %839 = vmatpush.bf16.msra.mxu0 %v628
    %840 = vmatpush.bf16.msra.mxu0 %v626
    %841 = vmatpush.bf16.msra.mxu0 %v624
    %842 = vmatpush.bf16.msra.mxu0 %v622
    %843 = vmatpush.bf16.msra.mxu0 %v620
    %844 = vmatpush.bf16.msra.mxu0 %v618
    %845 = vmatpush.bf16.msra.mxu0 %v616
    %846 = vmatmul.bf16.gmra.mxu0 %v251
    %v847 = vpop.f32.mrf.mxu0
    %v848 = vadd.f32 %v834, %v847
    %v849 = vpop.f32.mrf.mxu0
    %v850 = vadd.f32 %v836, %v849
    %851 = vdwg.mxu0
    %852 = vmatpush.bf16.msra.mxu0 %v646
    %853 = vmatpush.bf16.msra.mxu0 %v644
    %854 = vmatpush.bf16.msra.mxu0 %v642
    %855 = vmatpush.bf16.msra.mxu0 %v640
    %856 = vmatpush.bf16.msra.mxu0 %v638
    %857 = vmatpush.bf16.msra.mxu0 %v636
    %858 = vmatpush.bf16.msra.mxu0 %v634
    %859 = vmatpush.bf16.msra.mxu0 %v632
    %860 = vmatmul.bf16.gmra.mxu0 %v252
    %v861 = vpop.f32.mrf.mxu0
    %v862 = vadd.f32 %v848, %v861
    %v863 = vpop.f32.mrf.mxu0
    %v864 = vadd.f32 %v850, %v863
    %865 = vdwg.mxu0
    %866 = vmatpush.bf16.msra.mxu0 %v662
    %867 = vmatpush.bf16.msra.mxu0 %v660
    %868 = vmatpush.bf16.msra.mxu0 %v658
    %869 = vmatpush.bf16.msra.mxu0 %v656
    %870 = vmatpush.bf16.msra.mxu0 %v654
    %871 = vmatpush.bf16.msra.mxu0 %v652
    %872 = vmatpush.bf16.msra.mxu0 %v650
    %873 = vmatpush.bf16.msra.mxu0 %v648
    %874 = vmatmul.bf16.gmra.mxu0 %v253
    %v875 = vpop.f32.mrf.mxu0
    %v876 = vadd.f32 %v862, %v875
    %v877 = vpop.f32.mrf.mxu0
    %v878 = vadd.f32 %v864, %v877
    %879 = vdwg.mxu0
    %880 = vmatpush.bf16.msra.mxu0 %v678
    %881 = vmatpush.bf16.msra.mxu0 %v676
    %882 = vmatpush.bf16.msra.mxu0 %v674
    %883 = vmatpush.bf16.msra.mxu0 %v672
    %884 = vmatpush.bf16.msra.mxu0 %v670
    %885 = vmatpush.bf16.msra.mxu0 %v668
    %886 = vmatpush.bf16.msra.mxu0 %v666
    %887 = vmatpush.bf16.msra.mxu0 %v664
    %888 = vmatmul.bf16.gmra.mxu0 %v254
    %v889 = vpop.f32.mrf.mxu0
    %v890 = vadd.f32 %v876, %v889
    %v891 = vpop.f32.mrf.mxu0
    %v892 = vadd.f32 %v878, %v891
    %893 = vdwg.mxu0
    %894 = vmatpush.bf16.msra.mxu0 %v694
    %895 = vmatpush.bf16.msra.mxu0 %v692
    %896 = vmatpush.bf16.msra.mxu0 %v690
    %897 = vmatpush.bf16.msra.mxu0 %v688
    %898 = vmatpush.bf16.msra.mxu0 %v686
    %899 = vmatpush.bf16.msra.mxu0 %v684
    %900 = vmatpush.bf16.msra.mxu0 %v682
    %901 = vmatpush.bf16.msra.mxu0 %v680
    %902 = vmatmul.bf16.gmra.mxu0 %v255
    %v903 = vpop.f32.mrf.mxu0
    %v904 = vadd.f32 %v890, %v903
    %v905 = vpop.f32.mrf.mxu0
    %v906 = vadd.f32 %v892, %v905
    %907 = vdwg.mxu0
    %908 = vmatpush.bf16.msra.mxu0 %v710
    %909 = vmatpush.bf16.msra.mxu0 %v708
    %910 = vmatpush.bf16.msra.mxu0 %v706
    %911 = vmatpush.bf16.msra.mxu0 %v704
    %912 = vmatpush.bf16.msra.mxu0 %v702
    %913 = vmatpush.bf16.msra.mxu0 %v700
    %914 = vmatpush.bf16.msra.mxu0 %v698
    %915 = vmatpush.bf16.msra.mxu0 %v696
    %916 = vmatmul.bf16.gmra.mxu0 %v256
    %v917 = vpop.f32.mrf.mxu0
    %v918 = vadd.f32 %v904, %v917
    %v919 = vpop.f32.mrf.mxu0
    %v920 = vadd.f32 %v906, %v919
    %921 = vdwg.mxu0
    %922 = vmatpush.bf16.msra.mxu0 %v615
    %923 = vmatpush.bf16.msra.mxu0 %v613
    %924 = vmatpush.bf16.msra.mxu0 %v611
    %925 = vmatpush.bf16.msra.mxu0 %v609
    %926 = vmatpush.bf16.msra.mxu0 %v607
    %927 = vmatpush.bf16.msra.mxu0 %v605
    %928 = vmatpush.bf16.msra.mxu0 %v603
    %929 = vmatpush.bf16.msra.mxu0 %v601
    %930 = vmatmul.bf16.gmra.mxu0 %v250
    %v931 = vpop.f32.mrf.mxu0
    %v932 = vadd.f32 0.0, %v931
    %v933 = vpop.f32.mrf.mxu0
    %v934 = vadd.f32 0.0, %v933
    %935 = vdwg.mxu0
    %936 = vmatpush.bf16.msra.mxu0 %v631
    %937 = vmatpush.bf16.msra.mxu0 %v629
    %938 = vmatpush.bf16.msra.mxu0 %v627
    %939 = vmatpush.bf16.msra.mxu0 %v625
    %940 = vmatpush.bf16.msra.mxu0 %v623
    %941 = vmatpush.bf16.msra.mxu0 %v621
    %942 = vmatpush.bf16.msra.mxu0 %v619
    %943 = vmatpush.bf16.msra.mxu0 %v617
    %944 = vmatmul.bf16.gmra.mxu0 %v251
    %v945 = vpop.f32.mrf.mxu0
    %v946 = vadd.f32 %v932, %v945
    %v947 = vpop.f32.mrf.mxu0
    %v948 = vadd.f32 %v934, %v947
    %949 = vdwg.mxu0
    %950 = vmatpush.bf16.msra.mxu0 %v647
    %951 = vmatpush.bf16.msra.mxu0 %v645
    %952 = vmatpush.bf16.msra.mxu0 %v643
    %953 = vmatpush.bf16.msra.mxu0 %v641
    %954 = vmatpush.bf16.msra.mxu0 %v639
    %955 = vmatpush.bf16.msra.mxu0 %v637
    %956 = vmatpush.bf16.msra.mxu0 %v635
    %957 = vmatpush.bf16.msra.mxu0 %v633
    %958 = vmatmul.bf16.gmra.mxu0 %v252
    %v959 = vpop.f32.mrf.mxu0
    %v960 = vadd.f32 %v946, %v959
    %v961 = vpop.f32.mrf.mxu0
    %v962 = vadd.f32 %v948, %v961
    %963 = vdwg.mxu0
    %964 = vmatpush.bf16.msra.mxu0 %v663
    %965 = vmatpush.bf16.msra.mxu0 %v661
    %966 = vmatpush.bf16.msra.mxu0 %v659
    %967 = vmatpush.bf16.msra.mxu0 %v657
    %968 = vmatpush.bf16.msra.mxu0 %v655
    %969 = vmatpush.bf16.msra.mxu0 %v653
    %970 = vmatpush.bf16.msra.mxu0 %v651
    %971 = vmatpush.bf16.msra.mxu0 %v649
    %972 = vmatmul.bf16.gmra.mxu0 %v253
    %v973 = vpop.f32.mrf.mxu0
    %v974 = vadd.f32 %v960, %v973
    %v975 = vpop.f32.mrf.mxu0
    %v976 = vadd.f32 %v962, %v975
    %977 = vdwg.mxu0
    %978 = vmatpush.bf16.msra.mxu0 %v679
    %979 = vmatpush.bf16.msra.mxu0 %v677
    %980 = vmatpush.bf16.msra.mxu0 %v675
    %981 = vmatpush.bf16.msra.mxu0 %v673
    %982 = vmatpush.bf16.msra.mxu0 %v671
    %983 = vmatpush.bf16.msra.mxu0 %v669
    %984 = vmatpush.bf16.msra.mxu0 %v667
    %985 = vmatpush.bf16.msra.mxu0 %v665
    %986 = vmatmul.bf16.gmra.mxu0 %v254
    %v987 = vpop.f32.mrf.mxu0
    %v988 = vadd.f32 %v974, %v987
    %v989 = vpop.f32.mrf.mxu0
    %v990 = vadd.f32 %v976, %v989
    %991 = vdwg.mxu0
    %992 = vmatpush.bf16.msra.mxu0 %v695
    %993 = vmatpush.bf16.msra.mxu0 %v693
    %994 = vmatpush.bf16.msra.mxu0 %v691
    %995 = vmatpush.bf16.msra.mxu0 %v689
    %996 = vmatpush.bf16.msra.mxu0 %v687
    %997 = vmatpush.bf16.msra.mxu0 %v685
    %998 = vmatpush.bf16.msra.mxu0 %v683
    %999 = vmatpush.bf16.msra.mxu0 %v681
    %1000 = vmatmul.bf16.gmra.mxu0 %v255
    %v1001 = vpop.f32.mrf.mxu0
    %v1002 = vadd.f32 %v988, %v1001
    %v1003 = vpop.f32.mrf.mxu0
    %v1004 = vadd.f32 %v990, %v1003
    %1005 = vdwg.mxu0
    %1006 = vmatpush.bf16.msra.mxu0 %v711
    %1007 = vmatpush.bf16.msra.mxu0 %v709
    %1008 = vmatpush.bf16.msra.mxu0 %v707
    %1009 = vmatpush.bf16.msra.mxu0 %v705
    %1010 = vmatpush.bf16.msra.mxu0 %v703
    %1011 = vmatpush.bf16.msra.mxu0 %v701
    %1012 = vmatpush.bf16.msra.mxu0 %v699
    %1013 = vmatpush.bf16.msra.mxu0 %v697
    %1014 = vmatmul.bf16.gmra.mxu0 %v256
    %v1015 = vpop.f32.mrf.mxu0
    %v1016 = vadd.f32 %v1002, %v1015
    %v1017 = vpop.f32.mrf.mxu0
    %v1018 = vadd.f32 %v1004, %v1017
    %1019 = vdwg.mxu0
    %v1020 = vadd.f32 %v918, %v920
    %v1021 = vrot.slane %v1020, 4
    %v1022 = vadd.f32 %v1020, %v1021
    %v1023 = vrot.slane %v1022, 2
    %v1024 = vadd.f32 %v1022, %v1023
    %v1025 = vrot.slane %v1024, 1
    %v1026 = vadd.f32 %v1024, %v1025
    %v1027 = vadd.f32 %v1016, %v1018
    %v1028 = vrot.slane %v1027, 4
    %v1029 = vadd.f32 %v1027, %v1028
    %v1030 = vrot.slane %v1029, 2
    %v1031 = vadd.f32 %v1029, %v1030
    %v1032 = vrot.slane %v1031, 1
    %v1033 = vadd.f32 %v1031, %v1032
    %v1034 = vmul.f32 %v918, %v918
    %v1035 = vmul.f32 %v1016, %v1016
    %v1036 = vmul.f32 %v920, %v920
    %v1037 = vmul.f32 %v1018, %v1018
    %v1038 = vadd.f32 %v1034, %v1036
    %v1039 = vrot.slane %v1038, 4
    %v1040 = vadd.f32 %v1038, %v1039
    %v1041 = vrot.slane %v1040, 2
    %v1042 = vadd.f32 %v1040, %v1041
    %v1043 = vrot.slane %v1042, 1
    %v1044 = vadd.f32 %v1042, %v1043
    %v1045 = vadd.f32 %v1035, %v1037
    %v1046 = vrot.slane %v1045, 4
    %v1047 = vadd.f32 %v1045, %v1046
    %v1048 = vrot.slane %v1047, 2
    %v1049 = vadd.f32 %v1047, %v1048
    %v1050 = vrot.slane %v1049, 1
    %v1051 = vadd.f32 %v1049, %v1050
    %v1052 = vmul.f32 %v1026, 0.5
    %v1053 = vmul.f32 %v1033, 0.5
    %v1054 = vmul.f32 %v1044, 0.5
    %v1055 = vmul.f32 %v1051, 0.5
    %v1056 = vmul.f32 %v1052, %v1052
    %v1057 = vmul.f32 %v1053, %v1053
    %v1058 = vsub.f32 %v1054, %v1056
    %v1059 = vsub.f32 %v1055, %v1057
    %v1060 = vmax.f32 %v1058, 0.0
    %v1061 = vmax.f32 %v1059, 0.0
    %v1062 = vsub.f32 %v918, %v1052
    %v1063 = vsub.f32 %v1016, %v1053
    %v1064 = vsub.f32 %v920, %v1052
    %v1065 = vsub.f32 %v1018, %v1053
    %v1066 = vadd.f32 %v1060, 1e-05
    %v1067 = vadd.f32 %v1061, 1e-05
    %v1068 = vrsqrt.pop %v1066
    %v1069 = vmul.f32 %v1068, %v1066
    %v1070 = vmul.f32 %v1069, %v1068
    %v1071 = vmul.f32 0.5, %v1070
    %v1072 = vsub.f32 1.5, %v1071
    %v1073 = vmul.f32 %v1068, %v1072
    %vm1074 = vweird.f32 %v1066
    %vm1075 = vweird.f32 %v1068
    %vm1076 = vmor %vm1074, %vm1075
    %v1077 = vsel %vm1076, %v1068, %v1073
    %v1078 = vrsqrt.pop %v1067
    %v1079 = vmul.f32 %v1078, %v1067
    %v1080 = vmul.f32 %v1079, %v1078
    %v1081 = vmul.f32 0.5, %v1080
    %v1082 = vsub.f32 1.5, %v1081
    %v1083 = vmul.f32 %v1078, %v1082
    %vm1084 = vweird.f32 %v1067
    %vm1085 = vweird.f32 %v1078
    %vm1086 = vmor %vm1084, %vm1085
    %v1087 = vsel %vm1086, %v1078, %v1083
    %v1088 = vmul.f32 %v1062, %v1077
    %v1089 = vmul.f32 %v1063, %v1087
    %v1090 = vmul.f32 %v1064, %v1077
    %v1091 = vmul.f32 %v1065, %v1087
    %v1092 = vmax.f32 %v1088, 0.0
    %v1093 = vmax.f32 %v1089, 0.0
    %v1094 = vmax.f32 %v1090, 0.0
    %v1095 = vmax.f32 %v1091, 0.0
    %v1096 = vmul.f32 %v1092, %v106
    %v1097 = vmul.f32 %v1093, %v106
    %v1098 = vmul.f32 %v1094, %v107
    %v1099 = vmul.f32 %v1095, %v107
    %v1100 = vpack.c.bf16 %v1098, %v1096
    %v1101 = vpack.c.bf16 %v1099, %v1097
    %v1102 = vld [vmem:[#allocation4] sm:$0xff]
    %v1103 = vld [vmem:[#allocation4 + $0x8] sm:$0xff]
    %v1104 = vld [vmem:[#allocation4 + $0x10] sm:$0xff]
    %v1105 = vld [vmem:[#allocation4 + $0x18] sm:$0xff]
    %v1106 = vld [vmem:[#allocation4 + $0x20] sm:$0xff]
    %v1107 = vld [vmem:[#allocation4 + $0x28] sm:$0xff]
    %v1108 = vld [vmem:[#allocation4 + $0x30] sm:$0xff]
    %v1109 = vld [vmem:[#allocation4 + $0x38] sm:$0xff]
    %v1110 = vld [vmem:[#allocation4 + $0x40] sm:$0xff]
    %v1111 = vld [vmem:[#allocation4 + $0x48] sm:$0xff]
    %v1112 = vld [vmem:[#allocation4 + $0x50] sm:$0xff]
    %v1113 = vld [vmem:[#allocation4 + $0x58] sm:$0xff]
    %v1114 = vld [vmem:[#allocation4 + $0x60] sm:$0xff]
    %v1115 = vld [vmem:[#allocation4 + $0x68] sm:$0xff]
    %v1116 = vld [vmem:[#allocation4 + $0x70] sm:$0xff]
    %v1117 = vld [vmem:[#allocation4 + $0x78] sm:$0xff]
    %v1118 = vld [vmem:[#allocation4 + $0x80] sm:$0xff]
    %v1119 = vld [vmem:[#allocation4 + $0x88] sm:$0xff]
    %v1120 = vld [vmem:[#allocation4 + $0x90] sm:$0xff]
    %v1121 = vld [vmem:[#allocation4 + $0x98] sm:$0xff]
    %v1122 = vld [vmem:[#allocation4 + $0xa0] sm:$0xff]
    %v1123 = vld [vmem:[#allocation4 + $0xa8] sm:$0xff]
    %v1124 = vld [vmem:[#allocation4 + $0xb0] sm:$0xff]
    %v1125 = vld [vmem:[#allocation4 + $0xb8] sm:$0xff]
    %v1126 = vld [vmem:[#allocation4 + $0xc0] sm:$0xff]
    %v1127 = vld [vmem:[#allocation4 + $0xc8] sm:$0xff]
    %v1128 = vld [vmem:[#allocation4 + $0xd0] sm:$0xff]
    %v1129 = vld [vmem:[#allocation4 + $0xd8] sm:$0xff]
    %v1130 = vld [vmem:[#allocation4 + $0xe0] sm:$0xff]
    %v1131 = vld [vmem:[#allocation4 + $0xe8] sm:$0xff]
    %v1132 = vld [vmem:[#allocation4 + $0xf0] sm:$0xff]
    %v1133 = vld [vmem:[#allocation4 + $0xf8] sm:$0xff]
    %v1166 = vunpack.c.l.b16 %v1102
    %v1167 = vunpack.c.h.b16 %v1102
    %v1168 = vunpack.c.l.b16 %v1103
    %v1169 = vunpack.c.h.b16 %v1103
    %v1170 = vunpack.c.l.b16 %v1104
    %v1171 = vunpack.c.h.b16 %v1104
    %v1172 = vunpack.c.l.b16 %v1105
    %v1173 = vunpack.c.h.b16 %v1105
    %v1174 = vunpack.c.l.b16 %v1106
    %v1175 = vunpack.c.h.b16 %v1106
    %v1176 = vunpack.c.l.b16 %v1107
    %v1177 = vunpack.c.h.b16 %v1107
    %v1178 = vunpack.c.l.b16 %v1108
    %v1179 = vunpack.c.h.b16 %v1108
    %v1180 = vunpack.c.l.b16 %v1109
    %v1181 = vunpack.c.h.b16 %v1109
    %v1182 = vunpack.c.l.b16 %v1110
    %v1183 = vunpack.c.h.b16 %v1110
    %v1184 = vunpack.c.l.b16 %v1111
    %v1185 = vunpack.c.h.b16 %v1111
    %v1186 = vunpack.c.l.b16 %v1112
    %v1187 = vunpack.c.h.b16 %v1112
    %v1188 = vunpack.c.l.b16 %v1113
    %v1189 = vunpack.c.h.b16 %v1113
    %v1190 = vunpack.c.l.b16 %v1114
    %v1191 = vunpack.c.h.b16 %v1114
    %v1192 = vunpack.c.l.b16 %v1115
    %v1193 = vunpack.c.h.b16 %v1115
    %v1194 = vunpack.c.l.b16 %v1116
    %v1195 = vunpack.c.h.b16 %v1116
    %v1196 = vunpack.c.l.b16 %v1117
    %v1197 = vunpack.c.h.b16 %v1117
    %v1198 = vunpack.c.l.b16 %v1118
    %v1199 = vunpack.c.h.b16 %v1118
    %v1200 = vunpack.c.l.b16 %v1119
    %v1201 = vunpack.c.h.b16 %v1119
    %v1202 = vunpack.c.l.b16 %v1120
    %v1203 = vunpack.c.h.b16 %v1120
    %v1204 = vunpack.c.l.b16 %v1121
    %v1205 = vunpack.c.h.b16 %v1121
    %v1206 = vunpack.c.l.b16 %v1122
    %v1207 = vunpack.c.h.b16 %v1122
    %v1208 = vunpack.c.l.b16 %v1123
    %v1209 = vunpack.c.h.b16 %v1123
    %v1210 = vunpack.c.l.b16 %v1124
    %v1211 = vunpack.c.h.b16 %v1124
    %v1212 = vunpack.c.l.b16 %v1125
    %v1213 = vunpack.c.h.b16 %v1125
    %v1214 = vunpack.c.l.b16 %v1126
    %v1215 = vunpack.c.h.b16 %v1126
    %v1216 = vunpack.c.l.b16 %v1127
    %v1217 = vunpack.c.h.b16 %v1127
    %v1218 = vunpack.c.l.b16 %v1128
    %v1219 = vunpack.c.h.b16 %v1128
    %v1220 = vunpack.c.l.b16 %v1129
    %v1221 = vunpack.c.h.b16 %v1129
    %v1222 = vunpack.c.l.b16 %v1130
    %v1223 = vunpack.c.h.b16 %v1130
    %v1224 = vunpack.c.l.b16 %v1131
    %v1225 = vunpack.c.h.b16 %v1131
    %v1226 = vunpack.c.l.b16 %v1132
    %v1227 = vunpack.c.h.b16 %v1132
    %v1228 = vunpack.c.l.b16 %v1133
    %v1229 = vunpack.c.h.b16 %v1133
    %v1230 = vpack.c.b16 %v1168, %v1166
    %v1231 = vpack.c.b16 %v1169, %v1167
    %v1232 = vpack.c.b16 %v1172, %v1170
    %v1233 = vpack.c.b16 %v1173, %v1171
    %v1234 = vpack.c.b16 %v1176, %v1174
    %v1235 = vpack.c.b16 %v1177, %v1175
    %v1236 = vpack.c.b16 %v1180, %v1178
    %v1237 = vpack.c.b16 %v1181, %v1179
    %v1238 = vpack.c.b16 %v1184, %v1182
    %v1239 = vpack.c.b16 %v1185, %v1183
    %v1240 = vpack.c.b16 %v1188, %v1186
    %v1241 = vpack.c.b16 %v1189, %v1187
    %v1242 = vpack.c.b16 %v1192, %v1190
    %v1243 = vpack.c.b16 %v1193, %v1191
    %v1244 = vpack.c.b16 %v1196, %v1194
    %v1245 = vpack.c.b16 %v1197, %v1195
    %v1246 = vpack.c.b16 %v1200, %v1198
    %v1247 = vpack.c.b16 %v1201, %v1199
    %v1248 = vpack.c.b16 %v1204, %v1202
    %v1249 = vpack.c.b16 %v1205, %v1203
    %v1250 = vpack.c.b16 %v1208, %v1206
    %v1251 = vpack.c.b16 %v1209, %v1207
    %v1252 = vpack.c.b16 %v1212, %v1210
    %v1253 = vpack.c.b16 %v1213, %v1211
    %v1254 = vpack.c.b16 %v1216, %v1214
    %v1255 = vpack.c.b16 %v1217, %v1215
    %v1256 = vpack.c.b16 %v1220, %v1218
    %v1257 = vpack.c.b16 %v1221, %v1219
    %v1258 = vpack.c.b16 %v1224, %v1222
    %v1259 = vpack.c.b16 %v1225, %v1223
    %v1260 = vpack.c.b16 %v1228, %v1226
    %v1261 = vpack.c.b16 %v1229, %v1227
    %1294 = vmatpush.bf16.msra.mxu0 %v1244
    %1295 = vmatpush.bf16.msra.mxu0 %v1242
    %1296 = vmatpush.bf16.msra.mxu0 %v1240
    %1297 = vmatpush.bf16.msra.mxu0 %v1238
    %1298 = vmatpush.bf16.msra.mxu0 %v1236
    %1299 = vmatpush.bf16.msra.mxu0 %v1234
    %1300 = vmatpush.bf16.msra.mxu0 %v1232
    %1301 = vmatpush.bf16.msra.mxu0 %v1230
    %1302 = vmatmul.bf16.gmra.mxu0 %v1100
    %v1303 = vpop.f32.mrf.mxu0
    %v1304 = vadd.f32 0.0, %v1303
    %v1305 = vpop.f32.mrf.mxu0
    %v1306 = vadd.f32 0.0, %v1305
    %1307 = vdwg.mxu0
    %1308 = vmatpush.bf16.msra.mxu0 %v1260
    %1309 = vmatpush.bf16.msra.mxu0 %v1258
    %1310 = vmatpush.bf16.msra.mxu0 %v1256
    %1311 = vmatpush.bf16.msra.mxu0 %v1254
    %1312 = vmatpush.bf16.msra.mxu0 %v1252
    %1313 = vmatpush.bf16.msra.mxu0 %v1250
    %1314 = vmatpush.bf16.msra.mxu0 %v1248
    %1315 = vmatpush.bf16.msra.mxu0 %v1246
    %1316 = vmatmul.bf16.gmra.mxu0 %v1101
    %v1317 = vpop.f32.mrf.mxu0
    %v1318 = vadd.f32 %v1304, %v1317
    %v1319 = vpop.f32.mrf.mxu0
    %v1320 = vadd.f32 %v1306, %v1319
    %1321 = vdwg.mxu0
    %1322 = vmatpush.bf16.msra.mxu0 %v1245
    %1323 = vmatpush.bf16.msra.mxu0 %v1243
    %1324 = vmatpush.bf16.msra.mxu0 %v1241
    %1325 = vmatpush.bf16.msra.mxu0 %v1239
    %1326 = vmatpush.bf16.msra.mxu0 %v1237
    %1327 = vmatpush.bf16.msra.mxu0 %v1235
    %1328 = vmatpush.bf16.msra.mxu0 %v1233
    %1329 = vmatpush.bf16.msra.mxu0 %v1231
    %1330 = vmatmul.bf16.gmra.mxu0 %v1100
    %v1331 = vpop.f32.mrf.mxu0
    %v1332 = vadd.f32 0.0, %v1331
    %v1333 = vpop.f32.mrf.mxu0
    %v1334 = vadd.f32 0.0, %v1333
    %1335 = vdwg.mxu0
    %1336 = vmatpush.bf16.msra.mxu0 %v1261
    %1337 = vmatpush.bf16.msra.mxu0 %v1259
    %1338 = vmatpush.bf16.msra.mxu0 %v1257
    %1339 = vmatpush.bf16.msra.mxu0 %v1255
    %1340 = vmatpush.bf16.msra.mxu0 %v1253
    %1341 = vmatpush.bf16.msra.mxu0 %v1251
    %1342 = vmatpush.bf16.msra.mxu0 %v1249
    %1343 = vmatpush.bf16.msra.mxu0 %v1247
    %1344 = vmatmul.bf16.gmra.mxu0 %v1101
    %v1345 = vpop.f32.mrf.mxu0
    %v1346 = vadd.f32 %v1332, %v1345
    %v1347 = vpop.f32.mrf.mxu0
    %v1348 = vadd.f32 %v1334, %v1347
    %1349 = vdwg.mxu0
    %v1350 = vadd.f32 %v1318, %v1320
    %v1351 = vrot.slane %v1350, 4
    %v1352 = vadd.f32 %v1350, %v1351
    %v1353 = vrot.slane %v1352, 2
    %v1354 = vadd.f32 %v1352, %v1353
    %v1355 = vrot.slane %v1354, 1
    %v1356 = vadd.f32 %v1354, %v1355
    %v1357 = vadd.f32 %v1346, %v1348
    %v1358 = vrot.slane %v1357, 4
    %v1359 = vadd.f32 %v1357, %v1358
    %v1360 = vrot.slane %v1359, 2
    %v1361 = vadd.f32 %v1359, %v1360
    %v1362 = vrot.slane %v1361, 1
    %v1363 = vadd.f32 %v1361, %v1362
    %v1364 = vmul.f32 %v1318, %v1318
    %v1365 = vmul.f32 %v1346, %v1346
    %v1366 = vmul.f32 %v1320, %v1320
    %v1367 = vmul.f32 %v1348, %v1348
    %v1368 = vadd.f32 %v1364, %v1366
    %v1369 = vrot.slane %v1368, 4
    %v1370 = vadd.f32 %v1368, %v1369
    %v1371 = vrot.slane %v1370, 2
    %v1372 = vadd.f32 %v1370, %v1371
    %v1373 = vrot.slane %v1372, 1
    %v1374 = vadd.f32 %v1372, %v1373
    %v1375 = vadd.f32 %v1365, %v1367
    %v1376 = vrot.slane %v1375, 4
    %v1377 = vadd.f32 %v1375, %v1376
    %v1378 = vrot.slane %v1377, 2
    %v1379 = vadd.f32 %v1377, %v1378
    %v1380 = vrot.slane %v1379, 1
    %v1381 = vadd.f32 %v1379, %v1380
    %v1382 = vmul.f32 %v1356, 0.5
    %v1383 = vmul.f32 %v1363, 0.5
    %v1384 = vmul.f32 %v1374, 0.5
    %v1385 = vmul.f32 %v1381, 0.5
    %v1386 = vmul.f32 %v1382, %v1382
    %v1387 = vmul.f32 %v1383, %v1383
    %v1388 = vsub.f32 %v1384, %v1386
    %v1389 = vsub.f32 %v1385, %v1387
    %v1390 = vmax.f32 %v1388, 0.0
    %v1391 = vmax.f32 %v1389, 0.0
    %v1392 = vsub.f32 %v1318, %v1382
    %v1393 = vsub.f32 %v1346, %v1383
    %v1394 = vsub.f32 %v1320, %v1382
    %v1395 = vsub.f32 %v1348, %v1383
    %v1396 = vadd.f32 %v1390, 1e-05
    %v1397 = vadd.f32 %v1391, 1e-05
    %v1398 = vrsqrt.pop %v1396
    %v1399 = vmul.f32 %v1398, %v1396
    %v1400 = vmul.f32 %v1399, %v1398
    %v1401 = vmul.f32 0.5, %v1400
    %v1402 = vsub.f32 1.5, %v1401
    %v1403 = vmul.f32 %v1398, %v1402
    %vm1404 = vweird.f32 %v1396
    %vm1405 = vweird.f32 %v1398
    %vm1406 = vmor %vm1404, %vm1405
    %v1407 = vsel %vm1406, %v1398, %v1403
    %v1408 = vrsqrt.pop %v1397
    %v1409 = vmul.f32 %v1408, %v1397
    %v1410 = vmul.f32 %v1409, %v1408
    %v1411 = vmul.f32 0.5, %v1410
    %v1412 = vsub.f32 1.5, %v1411
    %v1413 = vmul.f32 %v1408, %v1412
    %vm1414 = vweird.f32 %v1397
    %vm1415 = vweird.f32 %v1408
    %vm1416 = vmor %vm1414, %vm1415
    %v1417 = vsel %vm1416, %v1408, %v1413
    %v1418 = vmul.f32 %v1392, %v1407
    %v1419 = vmul.f32 %v1393, %v1417
    %v1420 = vmul.f32 %v1394, %v1407
    %v1421 = vmul.f32 %v1395, %v1417
    %v1422 = vmax.f32 %v1418, 0.0
    %v1423 = vmax.f32 %v1419, 0.0
    %v1424 = vmax.f32 %v1420, 0.0
    %v1425 = vmax.f32 %v1421, 0.0
    %v1426 = vmul.f32 %v1422, %v106
    %v1427 = vmul.f32 %v1423, %v106
    %v1428 = vmul.f32 %v1424, %v107
    %v1429 = vmul.f32 %v1425, %v107
    %v1430 = vpack.c.bf16 %v1428, %v1426
    %v1431 = vpack.c.bf16 %v1429, %v1427
    %v1432 = vld [vmem:[%s4] sm:$0xf]
    %v1433 = vld [vmem:[%s4 + $0x4] sm:$0xf]
    %v1434 = vld [vmem:[%s4 + $0x8] sm:$0xf]
    %v1435 = vld [vmem:[%s4 + $0xc] sm:$0xf]
    %v1436 = vld [vmem:[%s4 + $0x10] sm:$0xf]
    %v1437 = vld [vmem:[%s4 + $0x14] sm:$0xf]
    %v1438 = vld [vmem:[%s4 + $0x18] sm:$0xf]
    %v1439 = vld [vmem:[%s4 + $0x1c] sm:$0xf]
    %v1440 = vld [vmem:[%s4 + $0x20] sm:$0xf]
    %v1441 = vld [vmem:[%s4 + $0x24] sm:$0xf]
    %v1442 = vld [vmem:[%s4 + $0x28] sm:$0xf]
    %v1443 = vld [vmem:[%s4 + $0x2c] sm:$0xf]
    %v1444 = vld [vmem:[%s4 + $0x30] sm:$0xf]
    %v1445 = vld [vmem:[%s4 + $0x34] sm:$0xf]
    %v1446 = vld [vmem:[%s4 + $0x38] sm:$0xf]
    %v1447 = vld [vmem:[%s4 + $0x3c] sm:$0xf]
    %v1448 = vld [vmem:[%s4 + $0x40] sm:$0xf]
    %v1449 = vld [vmem:[%s4 + $0x44] sm:$0xf]
    %v1450 = vld [vmem:[%s4 + $0x48] sm:$0xf]
    %v1451 = vld [vmem:[%s4 + $0x4c] sm:$0xf]
    %v1452 = vld [vmem:[%s4 + $0x50] sm:$0xf]
    %v1453 = vld [vmem:[%s4 + $0x54] sm:$0xf]
    %v1454 = vld [vmem:[%s4 + $0x58] sm:$0xf]
    %v1455 = vld [vmem:[%s4 + $0x5c] sm:$0xf]
    %v1456 = vld [vmem:[%s4 + $0x60] sm:$0xf]
    %v1457 = vld [vmem:[%s4 + $0x64] sm:$0xf]
    %v1458 = vld [vmem:[%s4 + $0x68] sm:$0xf]
    %v1459 = vld [vmem:[%s4 + $0x6c] sm:$0xf]
    %v1460 = vld [vmem:[%s4 + $0x70] sm:$0xf]
    %v1461 = vld [vmem:[%s4 + $0x74] sm:$0xf]
    %v1462 = vld [vmem:[%s4 + $0x78] sm:$0xf]
    %v1463 = vld [vmem:[%s4 + $0x7c] sm:$0xf]
    %v1464 = vld [vmem:[%s5] sm:$0x1]
    %v1466 = vperm.slane %v1464, 0
    %v1500 = vunpack.c.l.b16 %v1432
    %v1501 = vunpack.c.l.b16 %v1433
    %v1502 = vunpack.c.l.b16 %v1434
    %v1503 = vunpack.c.l.b16 %v1435
    %v1504 = vunpack.c.l.b16 %v1436
    %v1505 = vunpack.c.l.b16 %v1437
    %v1506 = vunpack.c.l.b16 %v1438
    %v1507 = vunpack.c.l.b16 %v1439
    %v1508 = vunpack.c.l.b16 %v1440
    %v1509 = vunpack.c.l.b16 %v1441
    %v1510 = vunpack.c.l.b16 %v1442
    %v1511 = vunpack.c.l.b16 %v1443
    %v1512 = vunpack.c.l.b16 %v1444
    %v1513 = vunpack.c.l.b16 %v1445
    %v1514 = vunpack.c.l.b16 %v1446
    %v1515 = vunpack.c.l.b16 %v1447
    %v1516 = vunpack.c.l.b16 %v1448
    %v1517 = vunpack.c.l.b16 %v1449
    %v1518 = vunpack.c.l.b16 %v1450
    %v1519 = vunpack.c.l.b16 %v1451
    %v1520 = vunpack.c.l.b16 %v1452
    %v1521 = vunpack.c.l.b16 %v1453
    %v1522 = vunpack.c.l.b16 %v1454
    %v1523 = vunpack.c.l.b16 %v1455
    %v1524 = vunpack.c.l.b16 %v1456
    %v1525 = vunpack.c.l.b16 %v1457
    %v1526 = vunpack.c.l.b16 %v1458
    %v1527 = vunpack.c.l.b16 %v1459
    %v1528 = vunpack.c.l.b16 %v1460
    %v1529 = vunpack.c.l.b16 %v1461
    %v1530 = vunpack.c.l.b16 %v1462
    %v1531 = vunpack.c.l.b16 %v1463
    %v1532 = vpack.c.b16 %v1501, %v1500
    %v1533 = vpack.c.b16 %v1503, %v1502
    %v1534 = vpack.c.b16 %v1505, %v1504
    %v1535 = vpack.c.b16 %v1507, %v1506
    %v1536 = vpack.c.b16 %v1509, %v1508
    %v1537 = vpack.c.b16 %v1511, %v1510
    %v1538 = vpack.c.b16 %v1513, %v1512
    %v1539 = vpack.c.b16 %v1515, %v1514
    %v1540 = vpack.c.b16 %v1517, %v1516
    %v1541 = vpack.c.b16 %v1519, %v1518
    %v1542 = vpack.c.b16 %v1521, %v1520
    %v1543 = vpack.c.b16 %v1523, %v1522
    %v1544 = vpack.c.b16 %v1525, %v1524
    %v1545 = vpack.c.b16 %v1527, %v1526
    %v1546 = vpack.c.b16 %v1529, %v1528
    %v1547 = vpack.c.b16 %v1531, %v1530
    %1564 = vmatpush.bf16.msra.mxu0 %v1539
    %1565 = vmatpush.bf16.msra.mxu0 %v1538
    %1566 = vmatpush.bf16.msra.mxu0 %v1537
    %1567 = vmatpush.bf16.msra.mxu0 %v1536
    %1568 = vmatpush.bf16.msra.mxu0 %v1535
    %1569 = vmatpush.bf16.msra.mxu0 %v1534
    %1570 = vmatpush.bf16.msra.mxu0 %v1533
    %1571 = vmatpush.bf16.msra.mxu0 %v1532
    %1572 = vmatmul.bf16.gmra.mxu0 %v1430
    %v1573 = vpop.f32.mrf.mxu0
    %v1574 = vadd.f32 %v1466, %v1573
    %v1575 = vpop.f32.mrf.mxu0
    %v1576 = vadd.f32 %v1466, %v1575
    %1577 = vdwg.mxu0
    %1578 = vmatpush.bf16.msra.mxu0 %v1547
    %1579 = vmatpush.bf16.msra.mxu0 %v1546
    %1580 = vmatpush.bf16.msra.mxu0 %v1545
    %1581 = vmatpush.bf16.msra.mxu0 %v1544
    %1582 = vmatpush.bf16.msra.mxu0 %v1543
    %1583 = vmatpush.bf16.msra.mxu0 %v1542
    %1584 = vmatpush.bf16.msra.mxu0 %v1541
    %1585 = vmatpush.bf16.msra.mxu0 %v1540
    %1586 = vmatmul.bf16.gmra.mxu0 %v1431
    %v1587 = vpop.f32.mrf.mxu0
    %v1588 = vadd.f32 %v1574, %v1587
    %v1589 = vpop.f32.mrf.mxu0
    %v1590 = vadd.f32 %v1576, %v1589
    %1591 = vdwg.mxu0
    %v1592 = vmul.f32 %v1588, 0.5
    %v1593 = vmul.f32 %v1590, 0.5
    %v1594 = vmul.f32 %v1592, 1.442695
    %v1595 = vpow.pop %v1594
    %v1596 = vmul.f32 %v1593, 1.442695
    %v1597 = vpow.pop %v1596
    %v1598 = vld [vmem:[%s1] sm:$0xff]
    %v1599 = vld [vmem:[%s1 + $0x8] sm:$0xff]
    %1602 = vrot.lane.b32.xlu0 %v1598, 10
    %v1603 = vpop.permute.xlu0 %1602
    %1604 = vrot.lane.b32.xlu0 %v1599, 10
    %v1605 = vpop.permute.xlu0 %1604
    %v1608 = vmul.f32 %v1595, %v1603
    %v1609 = vmul.f32 %v1597, %v1605
    %1612 = vrot.lane.b32.xlu0 %v1608, 118
    %v1613 = vpop.permute.xlu0 %1612
    %1614 = vrot.lane.b32.xlu0 %v1609, 118
    %v1615 = vpop.permute.xlu0 %1614
    %v1618 = vadd.f32 %v1588, %v1613
    %v1619 = vadd.f32 %v1590, %v1615
    %v1620 = vmul.f32 %v1618, %v106
    %v1621 = vmul.f32 %v1619, %v107
    %v1622 = vpack.c.bf16 %v1621, %v1620
    %v1623 = vld [vmem:[%s6] sm:$0xff]
    %v1624 = vld [vmem:[%s6 + $0x8] sm:$0x11]
    %v1627 = vunpack.c.l.b16 %v1623
    %v1628 = vunpack.c.h.b16 %v1623
    %v1629 = vunpack.c.l.b16 %v1624
    %v1630 = vunpack.c.h.b16 %v1624
    %v1631 = vpack.c.b16 %v1629, %v1627
    %v1632 = vpack.c.b16 %v1630, %v1628
    %vm1633 = vcmask 80896
    %v1635 = vsel %vm1633, %v1622, 0
    %vm1637 = vcmask 1044480
    %v1639 = vsel %vm1637, %v1631, 0
    %v1642 = vsel %vm1637, %v1632, 0
    %1644 = vmatpush.bf16.msra.mxu0 0
    %1645 = vmatpush.bf16.msra.mxu0 0
    %1646 = vmatpush.bf16.msra.mxu0 0
    %1647 = vmatpush.bf16.msra.mxu0 0
    %1648 = vmatpush.bf16.msra.mxu0 0
    %1649 = vmatpush.bf16.msra.mxu0 0
    %1650 = vmatpush.bf16.msra.mxu0 0
    %1651 = vmatpush.bf16.msra.mxu0 %v1639
    %1652 = vmatmul.bf16.gmra.mxu0 %v1635
    %v1653 = vpop.f32.mrf.mxu0
    %v1654 = vadd.f32 0.0, %v1653
    %v1655 = vpop.f32.mrf.mxu0
    %v1656 = vadd.f32 0.0, %v1655
    %1657 = vdwg.mxu0
    %1658 = vmatpush.bf16.msra.mxu0 0
    %1659 = vmatpush.bf16.msra.mxu0 0
    %1660 = vmatpush.bf16.msra.mxu0 0
    %1661 = vmatpush.bf16.msra.mxu0 0
    %1662 = vmatpush.bf16.msra.mxu0 0
    %1663 = vmatpush.bf16.msra.mxu0 0
    %1664 = vmatpush.bf16.msra.mxu0 0
    %1665 = vmatpush.bf16.msra.mxu0 %v1642
    %1666 = vmatmul.bf16.gmra.mxu0 %v1635
    %v1667 = vpop.f32.mrf.mxu0
    %v1668 = vadd.f32 0.0, %v1667
    %v1669 = vpop.f32.mrf.mxu0
    %v1670 = vadd.f32 0.0, %v1669
    %1671 = vdwg.mxu0
    %v1672 = vadd.f32 %v1654, %v1656
    %v1673 = vrot.slane %v1672, 4
    %v1674 = vadd.f32 %v1672, %v1673
    %v1675 = vrot.slane %v1674, 2
    %v1676 = vadd.f32 %v1674, %v1675
    %v1677 = vrot.slane %v1676, 1
    %v1678 = vadd.f32 %v1676, %v1677
    %v1679 = vadd.f32 %v1668, %v1670
    %v1680 = vrot.slane %v1679, 4
    %v1681 = vadd.f32 %v1679, %v1680
    %v1682 = vrot.slane %v1681, 2
    %v1683 = vadd.f32 %v1681, %v1682
    %v1684 = vrot.slane %v1683, 1
    %v1685 = vadd.f32 %v1683, %v1684
    %v1686 = vmul.f32 %v1654, %v1654
    %v1687 = vmul.f32 %v1668, %v1668
    %v1688 = vmul.f32 %v1656, %v1656
    %v1689 = vmul.f32 %v1670, %v1670
    %v1690 = vadd.f32 %v1686, %v1688
    %v1691 = vrot.slane %v1690, 4
    %v1692 = vadd.f32 %v1690, %v1691
    %v1693 = vrot.slane %v1692, 2
    %v1694 = vadd.f32 %v1692, %v1693
    %v1695 = vrot.slane %v1694, 1
    %v1696 = vadd.f32 %v1694, %v1695
    %v1697 = vadd.f32 %v1687, %v1689
    %v1698 = vrot.slane %v1697, 4
    %v1699 = vadd.f32 %v1697, %v1698
    %v1700 = vrot.slane %v1699, 2
    %v1701 = vadd.f32 %v1699, %v1700
    %v1702 = vrot.slane %v1701, 1
    %v1703 = vadd.f32 %v1701, %v1702
    %v1704 = vmul.f32 %v1678, 0.5
    %v1705 = vmul.f32 %v1685, 0.5
    %v1706 = vmul.f32 %v1696, 0.5
    %v1707 = vmul.f32 %v1703, 0.5
    %v1708 = vmul.f32 %v1704, %v1704
    %v1709 = vmul.f32 %v1705, %v1705
    %v1710 = vsub.f32 %v1706, %v1708
    %v1711 = vsub.f32 %v1707, %v1709
    %v1712 = vmax.f32 %v1710, 0.0
    %v1713 = vmax.f32 %v1711, 0.0
    %v1714 = vsub.f32 %v1654, %v1704
    %v1715 = vsub.f32 %v1668, %v1705
    %v1716 = vsub.f32 %v1656, %v1704
    %v1717 = vsub.f32 %v1670, %v1705
    %v1718 = vadd.f32 %v1712, 1e-05
    %v1719 = vadd.f32 %v1713, 1e-05
    %v1720 = vrsqrt.pop %v1718
    %v1721 = vmul.f32 %v1720, %v1718
    %v1722 = vmul.f32 %v1721, %v1720
    %v1723 = vmul.f32 0.5, %v1722
    %v1724 = vsub.f32 1.5, %v1723
    %v1725 = vmul.f32 %v1720, %v1724
    %vm1726 = vweird.f32 %v1718
    %vm1727 = vweird.f32 %v1720
    %vm1728 = vmor %vm1726, %vm1727
    %v1729 = vsel %vm1728, %v1720, %v1725
    %v1730 = vrsqrt.pop %v1719
    %v1731 = vmul.f32 %v1730, %v1719
    %v1732 = vmul.f32 %v1731, %v1730
    %v1733 = vmul.f32 0.5, %v1732
    %v1734 = vsub.f32 1.5, %v1733
    %v1735 = vmul.f32 %v1730, %v1734
    %vm1736 = vweird.f32 %v1719
    %vm1737 = vweird.f32 %v1730
    %vm1738 = vmor %vm1736, %vm1737
    %v1739 = vsel %vm1738, %v1730, %v1735
    %v1740 = vmul.f32 %v1714, %v1729
    %v1741 = vmul.f32 %v1715, %v1739
    %v1742 = vmul.f32 %v1716, %v1729
    %v1743 = vmul.f32 %v1717, %v1739
    %v1744 = vmax.f32 %v1740, 0.0
    %v1745 = vmax.f32 %v1741, 0.0
    %v1746 = vmax.f32 %v1742, 0.0
    %v1747 = vmax.f32 %v1743, 0.0
    %v1748 = vmul.f32 %v1744, %v106
    %v1749 = vmul.f32 %v1745, %v106
    %v1750 = vmul.f32 %v1746, %v107
    %v1751 = vmul.f32 %v1747, %v107
    %v1752 = vpack.c.bf16 %v1750, %v1748
    %v1753 = vpack.c.bf16 %v1751, %v1749
    %v1754 = vld [vmem:[#allocation6] sm:$0xff]
    %v1755 = vld [vmem:[#allocation6 + $0x8] sm:$0xff]
    %v1756 = vld [vmem:[#allocation6 + $0x10] sm:$0xff]
    %v1757 = vld [vmem:[#allocation6 + $0x18] sm:$0xff]
    %v1758 = vld [vmem:[#allocation6 + $0x20] sm:$0xff]
    %v1759 = vld [vmem:[#allocation6 + $0x28] sm:$0xff]
    %v1760 = vld [vmem:[#allocation6 + $0x30] sm:$0xff]
    %v1761 = vld [vmem:[#allocation6 + $0x38] sm:$0xff]
    %v1762 = vld [vmem:[#allocation6 + $0x40] sm:$0xff]
    %v1763 = vld [vmem:[#allocation6 + $0x48] sm:$0xff]
    %v1764 = vld [vmem:[#allocation6 + $0x50] sm:$0xff]
    %v1765 = vld [vmem:[#allocation6 + $0x58] sm:$0xff]
    %v1766 = vld [vmem:[#allocation6 + $0x60] sm:$0xff]
    %v1767 = vld [vmem:[#allocation6 + $0x68] sm:$0xff]
    %v1768 = vld [vmem:[#allocation6 + $0x70] sm:$0xff]
    %v1769 = vld [vmem:[#allocation6 + $0x78] sm:$0xff]
    %v1770 = vld [vmem:[#allocation6 + $0x80] sm:$0xff]
    %v1771 = vld [vmem:[#allocation6 + $0x88] sm:$0xff]
    %v1772 = vld [vmem:[#allocation6 + $0x90] sm:$0xff]
    %v1773 = vld [vmem:[#allocation6 + $0x98] sm:$0xff]
    %v1774 = vld [vmem:[#allocation6 + $0xa0] sm:$0xff]
    %v1775 = vld [vmem:[#allocation6 + $0xa8] sm:$0xff]
    %v1776 = vld [vmem:[#allocation6 + $0xb0] sm:$0xff]
    %v1777 = vld [vmem:[#allocation6 + $0xb8] sm:$0xff]
    %v1778 = vld [vmem:[#allocation6 + $0xc0] sm:$0xff]
    %v1779 = vld [vmem:[#allocation6 + $0xc8] sm:$0xff]
    %v1780 = vld [vmem:[#allocation6 + $0xd0] sm:$0xff]
    %v1781 = vld [vmem:[#allocation6 + $0xd8] sm:$0xff]
    %v1782 = vld [vmem:[#allocation6 + $0xe0] sm:$0xff]
    %v1783 = vld [vmem:[#allocation6 + $0xe8] sm:$0xff]
    %v1784 = vld [vmem:[#allocation6 + $0xf0] sm:$0xff]
    %v1785 = vld [vmem:[#allocation6 + $0xf8] sm:$0xff]
    %v1818 = vunpack.c.l.b16 %v1754
    %v1819 = vunpack.c.h.b16 %v1754
    %v1820 = vunpack.c.l.b16 %v1755
    %v1821 = vunpack.c.h.b16 %v1755
    %v1822 = vunpack.c.l.b16 %v1756
    %v1823 = vunpack.c.h.b16 %v1756
    %v1824 = vunpack.c.l.b16 %v1757
    %v1825 = vunpack.c.h.b16 %v1757
    %v1826 = vunpack.c.l.b16 %v1758
    %v1827 = vunpack.c.h.b16 %v1758
    %v1828 = vunpack.c.l.b16 %v1759
    %v1829 = vunpack.c.h.b16 %v1759
    %v1830 = vunpack.c.l.b16 %v1760
    %v1831 = vunpack.c.h.b16 %v1760
    %v1832 = vunpack.c.l.b16 %v1761
    %v1833 = vunpack.c.h.b16 %v1761
    %v1834 = vunpack.c.l.b16 %v1762
    %v1835 = vunpack.c.h.b16 %v1762
    %v1836 = vunpack.c.l.b16 %v1763
    %v1837 = vunpack.c.h.b16 %v1763
    %v1838 = vunpack.c.l.b16 %v1764
    %v1839 = vunpack.c.h.b16 %v1764
    %v1840 = vunpack.c.l.b16 %v1765
    %v1841 = vunpack.c.h.b16 %v1765
    %v1842 = vunpack.c.l.b16 %v1766
    %v1843 = vunpack.c.h.b16 %v1766
    %v1844 = vunpack.c.l.b16 %v1767
    %v1845 = vunpack.c.h.b16 %v1767
    %v1846 = vunpack.c.l.b16 %v1768
    %v1847 = vunpack.c.h.b16 %v1768
    %v1848 = vunpack.c.l.b16 %v1769
    %v1849 = vunpack.c.h.b16 %v1769
    %v1850 = vunpack.c.l.b16 %v1770
    %v1851 = vunpack.c.h.b16 %v1770
    %v1852 = vunpack.c.l.b16 %v1771
    %v1853 = vunpack.c.h.b16 %v1771
    %v1854 = vunpack.c.l.b16 %v1772
    %v1855 = vunpack.c.h.b16 %v1772
    %v1856 = vunpack.c.l.b16 %v1773
    %v1857 = vunpack.c.h.b16 %v1773
    %v1858 = vunpack.c.l.b16 %v1774
    %v1859 = vunpack.c.h.b16 %v1774
    %v1860 = vunpack.c.l.b16 %v1775
    %v1861 = vunpack.c.h.b16 %v1775
    %v1862 = vunpack.c.l.b16 %v1776
    %v1863 = vunpack.c.h.b16 %v1776
    %v1864 = vunpack.c.l.b16 %v1777
    %v1865 = vunpack.c.h.b16 %v1777
    %v1866 = vunpack.c.l.b16 %v1778
    %v1867 = vunpack.c.h.b16 %v1778
    %v1868 = vunpack.c.l.b16 %v1779
    %v1869 = vunpack.c.h.b16 %v1779
    %v1870 = vunpack.c.l.b16 %v1780
    %v1871 = vunpack.c.h.b16 %v1780
    %v1872 = vunpack.c.l.b16 %v1781
    %v1873 = vunpack.c.h.b16 %v1781
    %v1874 = vunpack.c.l.b16 %v1782
    %v1875 = vunpack.c.h.b16 %v1782
    %v1876 = vunpack.c.l.b16 %v1783
    %v1877 = vunpack.c.h.b16 %v1783
    %v1878 = vunpack.c.l.b16 %v1784
    %v1879 = vunpack.c.h.b16 %v1784
    %v1880 = vunpack.c.l.b16 %v1785
    %v1881 = vunpack.c.h.b16 %v1785
    %v1882 = vpack.c.b16 %v1820, %v1818
    %v1883 = vpack.c.b16 %v1821, %v1819
    %v1884 = vpack.c.b16 %v1824, %v1822
    %v1885 = vpack.c.b16 %v1825, %v1823
    %v1886 = vpack.c.b16 %v1828, %v1826
    %v1887 = vpack.c.b16 %v1829, %v1827
    %v1888 = vpack.c.b16 %v1832, %v1830
    %v1889 = vpack.c.b16 %v1833, %v1831
    %v1890 = vpack.c.b16 %v1836, %v1834
    %v1891 = vpack.c.b16 %v1837, %v1835
    %v1892 = vpack.c.b16 %v1840, %v1838
    %v1893 = vpack.c.b16 %v1841, %v1839
    %v1894 = vpack.c.b16 %v1844, %v1842
    %v1895 = vpack.c.b16 %v1845, %v1843
    %v1896 = vpack.c.b16 %v1848, %v1846
    %v1897 = vpack.c.b16 %v1849, %v1847
    %v1898 = vpack.c.b16 %v1852, %v1850
    %v1899 = vpack.c.b16 %v1853, %v1851
    %v1900 = vpack.c.b16 %v1856, %v1854
    %v1901 = vpack.c.b16 %v1857, %v1855
    %v1902 = vpack.c.b16 %v1860, %v1858
    %v1903 = vpack.c.b16 %v1861, %v1859
    %v1904 = vpack.c.b16 %v1864, %v1862
    %v1905 = vpack.c.b16 %v1865, %v1863
    %v1906 = vpack.c.b16 %v1868, %v1866
    %v1907 = vpack.c.b16 %v1869, %v1867
    %v1908 = vpack.c.b16 %v1872, %v1870
    %v1909 = vpack.c.b16 %v1873, %v1871
    %v1910 = vpack.c.b16 %v1876, %v1874
    %v1911 = vpack.c.b16 %v1877, %v1875
    %v1912 = vpack.c.b16 %v1880, %v1878
    %v1913 = vpack.c.b16 %v1881, %v1879
    %1946 = vmatpush.bf16.msra.mxu0 %v1896
    %1947 = vmatpush.bf16.msra.mxu0 %v1894
    %1948 = vmatpush.bf16.msra.mxu0 %v1892
    %1949 = vmatpush.bf16.msra.mxu0 %v1890
    %1950 = vmatpush.bf16.msra.mxu0 %v1888
    %1951 = vmatpush.bf16.msra.mxu0 %v1886
    %1952 = vmatpush.bf16.msra.mxu0 %v1884
    %1953 = vmatpush.bf16.msra.mxu0 %v1882
    %1954 = vmatmul.bf16.gmra.mxu0 %v1752
    %v1955 = vpop.f32.mrf.mxu0
    %v1956 = vadd.f32 0.0, %v1955
    %v1957 = vpop.f32.mrf.mxu0
    %v1958 = vadd.f32 0.0, %v1957
    %1959 = vdwg.mxu0
    %1960 = vmatpush.bf16.msra.mxu0 %v1912
    %1961 = vmatpush.bf16.msra.mxu0 %v1910
    %1962 = vmatpush.bf16.msra.mxu0 %v1908
    %1963 = vmatpush.bf16.msra.mxu0 %v1906
    %1964 = vmatpush.bf16.msra.mxu0 %v1904
    %1965 = vmatpush.bf16.msra.mxu0 %v1902
    %1966 = vmatpush.bf16.msra.mxu0 %v1900
    %1967 = vmatpush.bf16.msra.mxu0 %v1898
    %1968 = vmatmul.bf16.gmra.mxu0 %v1753
    %v1969 = vpop.f32.mrf.mxu0
    %v1970 = vadd.f32 %v1956, %v1969
    %v1971 = vpop.f32.mrf.mxu0
    %v1972 = vadd.f32 %v1958, %v1971
    %1973 = vdwg.mxu0
    %1974 = vmatpush.bf16.msra.mxu0 %v1897
    %1975 = vmatpush.bf16.msra.mxu0 %v1895
    %1976 = vmatpush.bf16.msra.mxu0 %v1893
    %1977 = vmatpush.bf16.msra.mxu0 %v1891
    %1978 = vmatpush.bf16.msra.mxu0 %v1889
    %1979 = vmatpush.bf16.msra.mxu0 %v1887
    %1980 = vmatpush.bf16.msra.mxu0 %v1885
    %1981 = vmatpush.bf16.msra.mxu0 %v1883
    %1982 = vmatmul.bf16.gmra.mxu0 %v1752
    %v1983 = vpop.f32.mrf.mxu0
    %v1984 = vadd.f32 0.0, %v1983
    %v1985 = vpop.f32.mrf.mxu0
    %v1986 = vadd.f32 0.0, %v1985
    %1987 = vdwg.mxu0
    %1988 = vmatpush.bf16.msra.mxu0 %v1913
    %1989 = vmatpush.bf16.msra.mxu0 %v1911
    %1990 = vmatpush.bf16.msra.mxu0 %v1909
    %1991 = vmatpush.bf16.msra.mxu0 %v1907
    %1992 = vmatpush.bf16.msra.mxu0 %v1905
    %1993 = vmatpush.bf16.msra.mxu0 %v1903
    %1994 = vmatpush.bf16.msra.mxu0 %v1901
    %1995 = vmatpush.bf16.msra.mxu0 %v1899
    %1996 = vmatmul.bf16.gmra.mxu0 %v1753
    %v1997 = vpop.f32.mrf.mxu0
    %v1998 = vadd.f32 %v1984, %v1997
    %v1999 = vpop.f32.mrf.mxu0
    %v2000 = vadd.f32 %v1986, %v1999
    %2001 = vdwg.mxu0
    %v2002 = vadd.f32 %v1970, %v1972
    %v2003 = vrot.slane %v2002, 4
    %v2004 = vadd.f32 %v2002, %v2003
    %v2005 = vrot.slane %v2004, 2
    %v2006 = vadd.f32 %v2004, %v2005
    %v2007 = vrot.slane %v2006, 1
    %v2008 = vadd.f32 %v2006, %v2007
    %v2009 = vadd.f32 %v1998, %v2000
    %v2010 = vrot.slane %v2009, 4
    %v2011 = vadd.f32 %v2009, %v2010
    %v2012 = vrot.slane %v2011, 2
    %v2013 = vadd.f32 %v2011, %v2012
    %v2014 = vrot.slane %v2013, 1
    %v2015 = vadd.f32 %v2013, %v2014
    %v2016 = vmul.f32 %v1970, %v1970
    %v2017 = vmul.f32 %v1998, %v1998
    %v2018 = vmul.f32 %v1972, %v1972
    %v2019 = vmul.f32 %v2000, %v2000
    %v2020 = vadd.f32 %v2016, %v2018
    %v2021 = vrot.slane %v2020, 4
    %v2022 = vadd.f32 %v2020, %v2021
    %v2023 = vrot.slane %v2022, 2
    %v2024 = vadd.f32 %v2022, %v2023
    %v2025 = vrot.slane %v2024, 1
    %v2026 = vadd.f32 %v2024, %v2025
    %v2027 = vadd.f32 %v2017, %v2019
    %v2028 = vrot.slane %v2027, 4
    %v2029 = vadd.f32 %v2027, %v2028
    %v2030 = vrot.slane %v2029, 2
    %v2031 = vadd.f32 %v2029, %v2030
    %v2032 = vrot.slane %v2031, 1
    %v2033 = vadd.f32 %v2031, %v2032
    %v2034 = vmul.f32 %v2008, 0.5
    %v2035 = vmul.f32 %v2015, 0.5
    %v2036 = vmul.f32 %v2026, 0.5
    %v2037 = vmul.f32 %v2033, 0.5
    %v2038 = vmul.f32 %v2034, %v2034
    %v2039 = vmul.f32 %v2035, %v2035
    %v2040 = vsub.f32 %v2036, %v2038
    %v2041 = vsub.f32 %v2037, %v2039
    %v2042 = vmax.f32 %v2040, 0.0
    %v2043 = vmax.f32 %v2041, 0.0
    %v2044 = vsub.f32 %v1970, %v2034
    %v2045 = vsub.f32 %v1998, %v2035
    %v2046 = vsub.f32 %v1972, %v2034
    %v2047 = vsub.f32 %v2000, %v2035
    %v2048 = vadd.f32 %v2042, 1e-05
    %v2049 = vadd.f32 %v2043, 1e-05
    %v2050 = vrsqrt.pop %v2048
    %v2051 = vmul.f32 %v2050, %v2048
    %v2052 = vmul.f32 %v2051, %v2050
    %v2053 = vmul.f32 0.5, %v2052
    %v2054 = vsub.f32 1.5, %v2053
    %v2055 = vmul.f32 %v2050, %v2054
    %vm2056 = vweird.f32 %v2048
    %vm2057 = vweird.f32 %v2050
    %vm2058 = vmor %vm2056, %vm2057
    %v2059 = vsel %vm2058, %v2050, %v2055
    %v2060 = vrsqrt.pop %v2049
    %v2061 = vmul.f32 %v2060, %v2049
    %v2062 = vmul.f32 %v2061, %v2060
    %v2063 = vmul.f32 0.5, %v2062
    %v2064 = vsub.f32 1.5, %v2063
    %v2065 = vmul.f32 %v2060, %v2064
    %vm2066 = vweird.f32 %v2049
    %vm2067 = vweird.f32 %v2060
    %vm2068 = vmor %vm2066, %vm2067
    %v2069 = vsel %vm2068, %v2060, %v2065
    %v2070 = vmul.f32 %v2044, %v2059
    %v2071 = vmul.f32 %v2045, %v2069
    %v2072 = vmul.f32 %v2046, %v2059
    %v2073 = vmul.f32 %v2047, %v2069
    %v2074 = vmax.f32 %v2070, 0.0
    %v2075 = vmax.f32 %v2071, 0.0
    %v2076 = vmax.f32 %v2072, 0.0
    %v2077 = vmax.f32 %v2073, 0.0
    %v2078 = vmul.f32 %v2074, %v106
    %v2079 = vmul.f32 %v2075, %v106
    %v2080 = vmul.f32 %v2076, %v107
    %v2081 = vmul.f32 %v2077, %v107
    %v2082 = vpack.c.bf16 %v2080, %v2078
    %v2083 = vpack.c.bf16 %v2081, %v2079
    %v2084 = vld [vmem:[#allocation7] sm:$0xff]
    %v2085 = vld [vmem:[#allocation7 + $0x8] sm:$0xff]
    %v2086 = vld [vmem:[#allocation7 + $0x10] sm:$0xff]
    %v2087 = vld [vmem:[#allocation7 + $0x18] sm:$0xf]
    %v2088 = vld [vmem:[#allocation7 + $0x1c] sm:$0xff]
    %v2089 = vld [vmem:[#allocation7 + $0x24] sm:$0xff]
    %v2090 = vld [vmem:[#allocation7 + $0x2c] sm:$0xff]
    %v2091 = vld [vmem:[#allocation7 + $0x34] sm:$0xf]
    %v2092 = vld [vmem:[#allocation7 + $0x38] sm:$0xff]
    %v2093 = vld [vmem:[#allocation7 + $0x40] sm:$0xff]
    %v2094 = vld [vmem:[#allocation7 + $0x48] sm:$0xff]
    %v2095 = vld [vmem:[#allocation7 + $0x50] sm:$0xf]
    %v2096 = vld [vmem:[#allocation7 + $0x54] sm:$0xff]
    %v2097 = vld [vmem:[#allocation7 + $0x5c] sm:$0xff]
    %v2098 = vld [vmem:[#allocation7 + $0x64] sm:$0xff]
    %v2099 = vld [vmem:[#allocation7 + $0x6c] sm:$0xf]
    %v2100 = vld [vmem:[#allocation7 + $0x70] sm:$0xff]
    %v2101 = vld [vmem:[#allocation7 + $0x78] sm:$0xff]
    %v2102 = vld [vmem:[#allocation7 + $0x80] sm:$0xff]
    %v2103 = vld [vmem:[#allocation7 + $0x88] sm:$0xf]
    %v2104 = vld [vmem:[#allocation7 + $0x8c] sm:$0xff]
    %v2105 = vld [vmem:[#allocation7 + $0x94] sm:$0xff]
    %v2106 = vld [vmem:[#allocation7 + $0x9c] sm:$0xff]
    %v2107 = vld [vmem:[#allocation7 + $0xa4] sm:$0xf]
    %v2108 = vld [vmem:[#allocation7 + $0xa8] sm:$0xff]
    %v2109 = vld [vmem:[#allocation7 + $0xb0] sm:$0xff]
    %v2110 = vld [vmem:[#allocation7 + $0xb8] sm:$0xff]
    %v2111 = vld [vmem:[#allocation7 + $0xc0] sm:$0xf]
    %v2112 = vld [vmem:[#allocation7 + $0xc4] sm:$0xff]
    %v2113 = vld [vmem:[#allocation7 + $0xcc] sm:$0xff]
    %v2114 = vld [vmem:[#allocation7 + $0xd4] sm:$0xff]
    %v2115 = vld [vmem:[#allocation7 + $0xdc] sm:$0xf]
    %v2116 = vld [vmem:[#allocation7 + $0xe0] sm:$0xff]
    %v2117 = vld [vmem:[#allocation7 + $0xe8] sm:$0xff]
    %v2118 = vld [vmem:[#allocation7 + $0xf0] sm:$0xff]
    %v2119 = vld [vmem:[#allocation7 + $0xf8] sm:$0xf]
    %v2120 = vld [vmem:[#allocation7 + $0xfc] sm:$0xff]
    %v2121 = vld [vmem:[#allocation7 + $0x104] sm:$0xff]
    %v2122 = vld [vmem:[#allocation7 + $0x10c] sm:$0xff]
    %v2123 = vld [vmem:[#allocation7 + $0x114] sm:$0xf]
    %v2124 = vld [vmem:[#allocation7 + $0x118] sm:$0xff]
    %v2125 = vld [vmem:[#allocation7 + $0x120] sm:$0xff]
    %v2126 = vld [vmem:[#allocation7 + $0x128] sm:$0xff]
    %v2127 = vld [vmem:[#allocation7 + $0x130] sm:$0xf]
    %v2128 = vld [vmem:[#allocation7 + $0x134] sm:$0xff]
    %v2129 = vld [vmem:[#allocation7 + $0x13c] sm:$0xff]
    %v2130 = vld [vmem:[#allocation7 + $0x144] sm:$0xff]
    %v2131 = vld [vmem:[#allocation7 + $0x14c] sm:$0xf]
    %v2132 = vld [vmem:[#allocation7 + $0x150] sm:$0xff]
    %v2133 = vld [vmem:[#allocation7 + $0x158] sm:$0xff]
    %v2134 = vld [vmem:[#allocation7 + $0x160] sm:$0xff]
    %v2135 = vld [vmem:[#allocation7 + $0x168] sm:$0xf]
    %v2136 = vld [vmem:[#allocation7 + $0x16c] sm:$0xff]
    %v2137 = vld [vmem:[#allocation7 + $0x174] sm:$0xff]
    %v2138 = vld [vmem:[#allocation7 + $0x17c] sm:$0xff]
    %v2139 = vld [vmem:[#allocation7 + $0x184] sm:$0xf]
    %v2140 = vld [vmem:[#allocation7 + $0x188] sm:$0xff]
    %v2141 = vld [vmem:[#allocation7 + $0x190] sm:$0xff]
    %v2142 = vld [vmem:[#allocation7 + $0x198] sm:$0xff]
    %v2143 = vld [vmem:[#allocation7 + $0x1a0] sm:$0xf]
    %v2144 = vld [vmem:[#allocation7 + $0x1a4] sm:$0xff]
    %v2145 = vld [vmem:[#allocation7 + $0x1ac] sm:$0xff]
    %v2146 = vld [vmem:[#allocation7 + $0x1b4] sm:$0xff]
    %v2147 = vld [vmem:[#allocation7 + $0x1bc] sm:$0xf]
    %v2148 = vld [vmem:[#allocation7 + $0x1c0] sm:$0xff]
    %v2149 = vld [vmem:[#allocation7 + $0x1c8] sm:$0xff]
    %v2150 = vld [vmem:[#allocation7 + $0x1d0] sm:$0xff]
    %v2151 = vld [vmem:[#allocation7 + $0x1d8] sm:$0xf]
    %v2152 = vld [vmem:[#allocation7 + $0x1dc] sm:$0xff]
    %v2153 = vld [vmem:[#allocation7 + $0x1e4] sm:$0xff]
    %v2154 = vld [vmem:[#allocation7 + $0x1ec] sm:$0xff]
    %v2155 = vld [vmem:[#allocation7 + $0x1f4] sm:$0xf]
    %v2156 = vld [vmem:[#allocation7 + $0x1f8] sm:$0xff]
    %v2157 = vld [vmem:[#allocation7 + $0x200] sm:$0xff]
    %v2158 = vld [vmem:[#allocation7 + $0x208] sm:$0xff]
    %v2159 = vld [vmem:[#allocation7 + $0x210] sm:$0xf]
    %v2160 = vld [vmem:[#allocation7 + $0x214] sm:$0xff]
    %v2161 = vld [vmem:[#allocation7 + $0x21c] sm:$0xff]
    %v2162 = vld [vmem:[#allocation7 + $0x224] sm:$0xff]
    %v2163 = vld [vmem:[#allocation7 + $0x22c] sm:$0xf]
    %v2164 = vld [vmem:[#allocation7 + $0x230] sm:$0xff]
    %v2165 = vld [vmem:[#allocation7 + $0x238] sm:$0xff]
    %v2166 = vld [vmem:[#allocation7 + $0x240] sm:$0xff]
    %v2167 = vld [vmem:[#allocation7 + $0x248] sm:$0xf]
    %v2168 = vld [vmem:[#allocation7 + $0x24c] sm:$0xff]
    %v2169 = vld [vmem:[#allocation7 + $0x254] sm:$0xff]
    %v2170 = vld [vmem:[#allocation7 + $0x25c] sm:$0xff]
    %v2171 = vld [vmem:[#allocation7 + $0x264] sm:$0xf]
    %v2172 = vld [vmem:[#allocation7 + $0x268] sm:$0xff]
    %v2173 = vld [vmem:[#allocation7 + $0x270] sm:$0xff]
    %v2174 = vld [vmem:[#allocation7 + $0x278] sm:$0xff]
    %v2175 = vld [vmem:[#allocation7 + $0x280] sm:$0xf]
    %v2176 = vld [vmem:[#allocation7 + $0x284] sm:$0xff]
    %v2177 = vld [vmem:[#allocation7 + $0x28c] sm:$0xff]
    %v2178 = vld [vmem:[#allocation7 + $0x294] sm:$0xff]
    %v2179 = vld [vmem:[#allocation7 + $0x29c] sm:$0xf]
    %v2180 = vld [vmem:[#allocation7 + $0x2a0] sm:$0xff]
    %v2181 = vld [vmem:[#allocation7 + $0x2a8] sm:$0xff]
    %v2182 = vld [vmem:[#allocation7 + $0x2b0] sm:$0xff]
    %v2183 = vld [vmem:[#allocation7 + $0x2b8] sm:$0xf]
    %v2184 = vld [vmem:[#allocation7 + $0x2bc] sm:$0xff]
    %v2185 = vld [vmem:[#allocation7 + $0x2c4] sm:$0xff]
    %v2186 = vld [vmem:[#allocation7 + $0x2cc] sm:$0xff]
    %v2187 = vld [vmem:[#allocation7 + $0x2d4] sm:$0xf]
    %v2188 = vld [vmem:[#allocation7 + $0x2d8] sm:$0xff]
    %v2189 = vld [vmem:[#allocation7 + $0x2e0] sm:$0xff]
    %v2190 = vld [vmem:[#allocation7 + $0x2e8] sm:$0xff]
    %v2191 = vld [vmem:[#allocation7 + $0x2f0] sm:$0xf]
    %v2192 = vld [vmem:[#allocation7 + $0x2f4] sm:$0xff]
    %v2193 = vld [vmem:[#allocation7 + $0x2fc] sm:$0xff]
    %v2194 = vld [vmem:[#allocation7 + $0x304] sm:$0xff]
    %v2195 = vld [vmem:[#allocation7 + $0x30c] sm:$0xf]
    %v2196 = vld [vmem:[#allocation7 + $0x310] sm:$0xff]
    %v2197 = vld [vmem:[#allocation7 + $0x318] sm:$0xff]
    %v2198 = vld [vmem:[#allocation7 + $0x320] sm:$0xff]
    %v2199 = vld [vmem:[#allocation7 + $0x328] sm:$0xf]
    %v2200 = vld [vmem:[#allocation7 + $0x32c] sm:$0xff]
    %v2201 = vld [vmem:[#allocation7 + $0x334] sm:$0xff]
    %v2202 = vld [vmem:[#allocation7 + $0x33c] sm:$0xff]
    %v2203 = vld [vmem:[#allocation7 + $0x344] sm:$0xf]
    %v2204 = vld [vmem:[#allocation7 + $0x348] sm:$0xff]
    %v2205 = vld [vmem:[#allocation7 + $0x350] sm:$0xff]
    %v2206 = vld [vmem:[#allocation7 + $0x358] sm:$0xff]
    %v2207 = vld [vmem:[#allocation7 + $0x360] sm:$0xf]
    %v2208 = vld [vmem:[#allocation7 + $0x364] sm:$0xff]
    %v2209 = vld [vmem:[#allocation7 + $0x36c] sm:$0xff]
    %v2210 = vld [vmem:[#allocation7 + $0x374] sm:$0xff]
    %v2211 = vld [vmem:[#allocation7 + $0x37c] sm:$0xf]
    %v2212 = vld [vmem:[%s9] sm:$0xff]
    %v2214 = vperm.slane %v2212, 0
    %v2215 = vperm.slane %v2212, 1
    %v2216 = vperm.slane %v2212, 2
    %v2217 = vperm.slane %v2212, 3
    %v2218 = vperm.slane %v2212, 4
    %v2219 = vperm.slane %v2212, 5
    %v2220 = vperm.slane %v2212, 6
    %v2356 = vunpack.c.l.b16 %v2084
    %v2357 = vunpack.c.h.b16 %v2084
    %v2358 = vunpack.c.l.b16 %v2085
    %v2359 = vunpack.c.h.b16 %v2085
    %v2360 = vunpack.c.l.b16 %v2086
    %v2361 = vunpack.c.h.b16 %v2086
    %v2362 = vunpack.c.l.b16 %v2087
    %v2363 = vunpack.c.l.b16 %v2088
    %v2364 = vunpack.c.h.b16 %v2088
    %v2365 = vunpack.c.l.b16 %v2089
    %v2366 = vunpack.c.h.b16 %v2089
    %v2367 = vunpack.c.l.b16 %v2090
    %v2368 = vunpack.c.h.b16 %v2090
    %v2369 = vunpack.c.l.b16 %v2091
    %v2370 = vunpack.c.l.b16 %v2092
    %v2371 = vunpack.c.h.b16 %v2092
    %v2372 = vunpack.c.l.b16 %v2093
    %v2373 = vunpack.c.h.b16 %v2093
    %v2374 = vunpack.c.l.b16 %v2094
    %v2375 = vunpack.c.h.b16 %v2094
    %v2376 = vunpack.c.l.b16 %v2095
    %v2377 = vunpack.c.l.b16 %v2096
    %v2378 = vunpack.c.h.b16 %v2096
    %v2379 = vunpack.c.l.b16 %v2097
    %v2380 = vunpack.c.h.b16 %v2097
    %v2381 = vunpack.c.l.b16 %v2098
    %v2382 = vunpack.c.h.b16 %v2098
    %v2383 = vunpack.c.l.b16 %v2099
    %v2384 = vunpack.c.l.b16 %v2100
    %v2385 = vunpack.c.h.b16 %v2100
    %v2386 = vunpack.c.l.b16 %v2101
    %v2387 = vunpack.c.h.b16 %v2101
    %v2388 = vunpack.c.l.b16 %v2102
    %v2389 = vunpack.c.h.b16 %v2102
    %v2390 = vunpack.c.l.b16 %v2103
    %v2391 = vunpack.c.l.b16 %v2104
    %v2392 = vunpack.c.h.b16 %v2104
    %v2393 = vunpack.c.l.b16 %v2105
    %v2394 = vunpack.c.h.b16 %v2105
    %v2395 = vunpack.c.l.b16 %v2106
    %v2396 = vunpack.c.h.b16 %v2106
    %v2397 = vunpack.c.l.b16 %v2107
    %v2398 = vunpack.c.l.b16 %v2108
    %v2399 = vunpack.c.h.b16 %v2108
    %v2400 = vunpack.c.l.b16 %v2109
    %v2401 = vunpack.c.h.b16 %v2109
    %v2402 = vunpack.c.l.b16 %v2110
    %v2403 = vunpack.c.h.b16 %v2110
    %v2404 = vunpack.c.l.b16 %v2111
    %v2405 = vunpack.c.l.b16 %v2112
    %v2406 = vunpack.c.h.b16 %v2112
    %v2407 = vunpack.c.l.b16 %v2113
    %v2408 = vunpack.c.h.b16 %v2113
    %v2409 = vunpack.c.l.b16 %v2114
    %v2410 = vunpack.c.h.b16 %v2114
    %v2411 = vunpack.c.l.b16 %v2115
    %v2412 = vunpack.c.l.b16 %v2116
    %v2413 = vunpack.c.h.b16 %v2116
    %v2414 = vunpack.c.l.b16 %v2117
    %v2415 = vunpack.c.h.b16 %v2117
    %v2416 = vunpack.c.l.b16 %v2118
    %v2417 = vunpack.c.h.b16 %v2118
    %v2418 = vunpack.c.l.b16 %v2119
    %v2419 = vunpack.c.l.b16 %v2120
    %v2420 = vunpack.c.h.b16 %v2120
    %v2421 = vunpack.c.l.b16 %v2121
    %v2422 = vunpack.c.h.b16 %v2121
    %v2423 = vunpack.c.l.b16 %v2122
    %v2424 = vunpack.c.h.b16 %v2122
    %v2425 = vunpack.c.l.b16 %v2123
    %v2426 = vunpack.c.l.b16 %v2124
    %v2427 = vunpack.c.h.b16 %v2124
    %v2428 = vunpack.c.l.b16 %v2125
    %v2429 = vunpack.c.h.b16 %v2125
    %v2430 = vunpack.c.l.b16 %v2126
    %v2431 = vunpack.c.h.b16 %v2126
    %v2432 = vunpack.c.l.b16 %v2127
    %v2433 = vunpack.c.l.b16 %v2128
    %v2434 = vunpack.c.h.b16 %v2128
    %v2435 = vunpack.c.l.b16 %v2129
    %v2436 = vunpack.c.h.b16 %v2129
    %v2437 = vunpack.c.l.b16 %v2130
    %v2438 = vunpack.c.h.b16 %v2130
    %v2439 = vunpack.c.l.b16 %v2131
    %v2440 = vunpack.c.l.b16 %v2132
    %v2441 = vunpack.c.h.b16 %v2132
    %v2442 = vunpack.c.l.b16 %v2133
    %v2443 = vunpack.c.h.b16 %v2133
    %v2444 = vunpack.c.l.b16 %v2134
    %v2445 = vunpack.c.h.b16 %v2134
    %v2446 = vunpack.c.l.b16 %v2135
    %v2447 = vunpack.c.l.b16 %v2136
    %v2448 = vunpack.c.h.b16 %v2136
    %v2449 = vunpack.c.l.b16 %v2137
    %v2450 = vunpack.c.h.b16 %v2137
    %v2451 = vunpack.c.l.b16 %v2138
    %v2452 = vunpack.c.h.b16 %v2138
    %v2453 = vunpack.c.l.b16 %v2139
    %v2454 = vunpack.c.l.b16 %v2140
    %v2455 = vunpack.c.h.b16 %v2140
    %v2456 = vunpack.c.l.b16 %v2141
    %v2457 = vunpack.c.h.b16 %v2141
    %v2458 = vunpack.c.l.b16 %v2142
    %v2459 = vunpack.c.h.b16 %v2142
    %v2460 = vunpack.c.l.b16 %v2143
    %v2461 = vunpack.c.l.b16 %v2144
    %v2462 = vunpack.c.h.b16 %v2144
    %v2463 = vunpack.c.l.b16 %v2145
    %v2464 = vunpack.c.h.b16 %v2145
    %v2465 = vunpack.c.l.b16 %v2146
    %v2466 = vunpack.c.h.b16 %v2146
    %v2467 = vunpack.c.l.b16 %v2147
    %v2468 = vunpack.c.l.b16 %v2148
    %v2469 = vunpack.c.h.b16 %v2148
    %v2470 = vunpack.c.l.b16 %v2149
    %v2471 = vunpack.c.h.b16 %v2149
    %v2472 = vunpack.c.l.b16 %v2150
    %v2473 = vunpack.c.h.b16 %v2150
    %v2474 = vunpack.c.l.b16 %v2151
    %v2475 = vunpack.c.l.b16 %v2152
    %v2476 = vunpack.c.h.b16 %v2152
    %v2477 = vunpack.c.l.b16 %v2153
    %v2478 = vunpack.c.h.b16 %v2153
    %v2479 = vunpack.c.l.b16 %v2154
    %v2480 = vunpack.c.h.b16 %v2154
    %v2481 = vunpack.c.l.b16 %v2155
    %v2482 = vunpack.c.l.b16 %v2156
    %v2483 = vunpack.c.h.b16 %v2156
    %v2484 = vunpack.c.l.b16 %v2157
    %v2485 = vunpack.c.h.b16 %v2157
    %v2486 = vunpack.c.l.b16 %v2158
    %v2487 = vunpack.c.h.b16 %v2158
    %v2488 = vunpack.c.l.b16 %v2159
    %v2489 = vunpack.c.l.b16 %v2160
    %v2490 = vunpack.c.h.b16 %v2160
    %v2491 = vunpack.c.l.b16 %v2161
    %v2492 = vunpack.c.h.b16 %v2161
    %v2493 = vunpack.c.l.b16 %v2162
    %v2494 = vunpack.c.h.b16 %v2162
    %v2495 = vunpack.c.l.b16 %v2163
    %v2496 = vunpack.c.l.b16 %v2164
    %v2497 = vunpack.c.h.b16 %v2164
    %v2498 = vunpack.c.l.b16 %v2165
    %v2499 = vunpack.c.h.b16 %v2165
    %v2500 = vunpack.c.l.b16 %v2166
    %v2501 = vunpack.c.h.b16 %v2166
    %v2502 = vunpack.c.l.b16 %v2167
    %v2503 = vunpack.c.l.b16 %v2168
    %v2504 = vunpack.c.h.b16 %v2168
    %v2505 = vunpack.c.l.b16 %v2169
    %v2506 = vunpack.c.h.b16 %v2169
    %v2507 = vunpack.c.l.b16 %v2170
    %v2508 = vunpack.c.h.b16 %v2170
    %v2509 = vunpack.c.l.b16 %v2171
    %v2510 = vunpack.c.l.b16 %v2172
    %v2511 = vunpack.c.h.b16 %v2172
    %v2512 = vunpack.c.l.b16 %v2173
    %v2513 = vunpack.c.h.b16 %v2173
    %v2514 = vunpack.c.l.b16 %v2174
    %v2515 = vunpack.c.h.b16 %v2174
    %v2516 = vunpack.c.l.b16 %v2175
    %v2517 = vunpack.c.l.b16 %v2176
    %v2518 = vunpack.c.h.b16 %v2176
    %v2519 = vunpack.c.l.b16 %v2177
    %v2520 = vunpack.c.h.b16 %v2177
    %v2521 = vunpack.c.l.b16 %v2178
    %v2522 = vunpack.c.h.b16 %v2178
    %v2523 = vunpack.c.l.b16 %v2179
    %v2524 = vunpack.c.l.b16 %v2180
    %v2525 = vunpack.c.h.b16 %v2180
    %v2526 = vunpack.c.l.b16 %v2181
    %v2527 = vunpack.c.h.b16 %v2181
    %v2528 = vunpack.c.l.b16 %v2182
    %v2529 = vunpack.c.h.b16 %v2182
    %v2530 = vunpack.c.l.b16 %v2183
    %v2531 = vunpack.c.l.b16 %v2184
    %v2532 = vunpack.c.h.b16 %v2184
    %v2533 = vunpack.c.l.b16 %v2185
    %v2534 = vunpack.c.h.b16 %v2185
    %v2535 = vunpack.c.l.b16 %v2186
    %v2536 = vunpack.c.h.b16 %v2186
    %v2537 = vunpack.c.l.b16 %v2187
    %v2538 = vunpack.c.l.b16 %v2188
    %v2539 = vunpack.c.h.b16 %v2188
    %v2540 = vunpack.c.l.b16 %v2189
    %v2541 = vunpack.c.h.b16 %v2189
    %v2542 = vunpack.c.l.b16 %v2190
    %v2543 = vunpack.c.h.b16 %v2190
    %v2544 = vunpack.c.l.b16 %v2191
    %v2545 = vunpack.c.l.b16 %v2192
    %v2546 = vunpack.c.h.b16 %v2192
    %v2547 = vunpack.c.l.b16 %v2193
    %v2548 = vunpack.c.h.b16 %v2193
    %v2549 = vunpack.c.l.b16 %v2194
    %v2550 = vunpack.c.h.b16 %v2194
    %v2551 = vunpack.c.l.b16 %v2195
    %v2552 = vunpack.c.l.b16 %v2196
    %v2553 = vunpack.c.h.b16 %v2196
    %v2554 = vunpack.c.l.b16 %v2197
    %v2555 = vunpack.c.h.b16 %v2197
    %v2556 = vunpack.c.l.b16 %v2198
    %v2557 = vunpack.c.h.b16 %v2198
    %v2558 = vunpack.c.l.b16 %v2199
    %v2559 = vunpack.c.l.b16 %v2200
    %v2560 = vunpack.c.h.b16 %v2200
    %v2561 = vunpack.c.l.b16 %v2201
    %v2562 = vunpack.c.h.b16 %v2201
    %v2563 = vunpack.c.l.b16 %v2202
    %v2564 = vunpack.c.h.b16 %v2202
    %v2565 = vunpack.c.l.b16 %v2203
    %v2566 = vunpack.c.l.b16 %v2204
    %v2567 = vunpack.c.h.b16 %v2204
    %v2568 = vunpack.c.l.b16 %v2205
    %v2569 = vunpack.c.h.b16 %v2205
    %v2570 = vunpack.c.l.b16 %v2206
    %v2571 = vunpack.c.h.b16 %v2206
    %v2572 = vunpack.c.l.b16 %v2207
    %v2573 = vunpack.c.l.b16 %v2208
    %v2574 = vunpack.c.h.b16 %v2208
    %v2575 = vunpack.c.l.b16 %v2209
    %v2576 = vunpack.c.h.b16 %v2209
    %v2577 = vunpack.c.l.b16 %v2210
    %v2578 = vunpack.c.h.b16 %v2210
    %v2579 = vunpack.c.l.b16 %v2211
    %v2580 = vpack.c.b16 %v2363, %v2356
    %v2581 = vpack.c.b16 %v2364, %v2357
    %v2582 = vpack.c.b16 %v2365, %v2358
    %v2583 = vpack.c.b16 %v2366, %v2359
    %v2584 = vpack.c.b16 %v2367, %v2360
    %v2585 = vpack.c.b16 %v2368, %v2361
    %v2586 = vpack.c.b16 %v2369, %v2362
    %v2587 = vpack.c.b16 %v2377, %v2370
    %v2588 = vpack.c.b16 %v2378, %v2371
    %v2589 = vpack.c.b16 %v2379, %v2372
    %v2590 = vpack.c.b16 %v2380, %v2373
    %v2591 = vpack.c.b16 %v2381, %v2374
    %v2592 = vpack.c.b16 %v2382, %v2375
    %v2593 = vpack.c.b16 %v2383, %v2376
    %v2594 = vpack.c.b16 %v2391, %v2384
    %v2595 = vpack.c.b16 %v2392, %v2385
    %v2596 = vpack.c.b16 %v2393, %v2386
    %v2597 = vpack.c.b16 %v2394, %v2387
    %v2598 = vpack.c.b16 %v2395, %v2388
    %v2599 = vpack.c.b16 %v2396, %v2389
    %v2600 = vpack.c.b16 %v2397, %v2390
    %v2601 = vpack.c.b16 %v2405, %v2398
    %v2602 = vpack.c.b16 %v2406, %v2399
    %v2603 = vpack.c.b16 %v2407, %v2400
    %v2604 = vpack.c.b16 %v2408, %v2401
    %v2605 = vpack.c.b16 %v2409, %v2402
    %v2606 = vpack.c.b16 %v2410, %v2403
    %v2607 = vpack.c.b16 %v2411, %v2404
    %v2608 = vpack.c.b16 %v2419, %v2412
    %v2609 = vpack.c.b16 %v2420, %v2413
    %v2610 = vpack.c.b16 %v2421, %v2414
    %v2611 = vpack.c.b16 %v2422, %v2415
    %v2612 = vpack.c.b16 %v2423, %v2416
    %v2613 = vpack.c.b16 %v2424, %v2417
    %v2614 = vpack.c.b16 %v2425, %v2418
    %v2615 = vpack.c.b16 %v2433, %v2426
    %v2616 = vpack.c.b16 %v2434, %v2427
    %v2617 = vpack.c.b16 %v2435, %v2428
    %v2618 = vpack.c.b16 %v2436, %v2429
    %v2619 = vpack.c.b16 %v2437, %v2430
    %v2620 = vpack.c.b16 %v2438, %v2431
    %v2621 = vpack.c.b16 %v2439, %v2432
    %v2622 = vpack.c.b16 %v2447, %v2440
    %v2623 = vpack.c.b16 %v2448, %v2441
    %v2624 = vpack.c.b16 %v2449, %v2442
    %v2625 = vpack.c.b16 %v2450, %v2443
    %v2626 = vpack.c.b16 %v2451, %v2444
    %v2627 = vpack.c.b16 %v2452, %v2445
    %v2628 = vpack.c.b16 %v2453, %v2446
    %v2629 = vpack.c.b16 %v2461, %v2454
    %v2630 = vpack.c.b16 %v2462, %v2455
    %v2631 = vpack.c.b16 %v2463, %v2456
    %v2632 = vpack.c.b16 %v2464, %v2457
    %v2633 = vpack.c.b16 %v2465, %v2458
    %v2634 = vpack.c.b16 %v2466, %v2459
    %v2635 = vpack.c.b16 %v2467, %v2460
    %v2636 = vpack.c.b16 %v2475, %v2468
    %v2637 = vpack.c.b16 %v2476, %v2469
    %v2638 = vpack.c.b16 %v2477, %v2470
    %v2639 = vpack.c.b16 %v2478, %v2471
    %v2640 = vpack.c.b16 %v2479, %v2472
    %v2641 = vpack.c.b16 %v2480, %v2473
    %v2642 = vpack.c.b16 %v2481, %v2474
    %v2643 = vpack.c.b16 %v2489, %v2482
    %v2644 = vpack.c.b16 %v2490, %v2483
    %v2645 = vpack.c.b16 %v2491, %v2484
    %v2646 = vpack.c.b16 %v2492, %v2485
    %v2647 = vpack.c.b16 %v2493, %v2486
    %v2648 = vpack.c.b16 %v2494, %v2487
    %v2649 = vpack.c.b16 %v2495, %v2488
    %v2650 = vpack.c.b16 %v2503, %v2496
    %v2651 = vpack.c.b16 %v2504, %v2497
    %v2652 = vpack.c.b16 %v2505, %v2498
    %v2653 = vpack.c.b16 %v2506, %v2499
    %v2654 = vpack.c.b16 %v2507, %v2500
    %v2655 = vpack.c.b16 %v2508, %v2501
    %v2656 = vpack.c.b16 %v2509, %v2502
    %v2657 = vpack.c.b16 %v2517, %v2510
    %v2658 = vpack.c.b16 %v2518, %v2511
    %v2659 = vpack.c.b16 %v2519, %v2512
    %v2660 = vpack.c.b16 %v2520, %v2513
    %v2661 = vpack.c.b16 %v2521, %v2514
    %v2662 = vpack.c.b16 %v2522, %v2515
    %v2663 = vpack.c.b16 %v2523, %v2516
    %v2664 = vpack.c.b16 %v2531, %v2524
    %v2665 = vpack.c.b16 %v2532, %v2525
    %v2666 = vpack.c.b16 %v2533, %v2526
    %v2667 = vpack.c.b16 %v2534, %v2527
    %v2668 = vpack.c.b16 %v2535, %v2528
    %v2669 = vpack.c.b16 %v2536, %v2529
    %v2670 = vpack.c.b16 %v2537, %v2530
    %v2671 = vpack.c.b16 %v2545, %v2538
    %v2672 = vpack.c.b16 %v2546, %v2539
    %v2673 = vpack.c.b16 %v2547, %v2540
    %v2674 = vpack.c.b16 %v2548, %v2541
    %v2675 = vpack.c.b16 %v2549, %v2542
    %v2676 = vpack.c.b16 %v2550, %v2543
    %v2677 = vpack.c.b16 %v2551, %v2544
    %v2678 = vpack.c.b16 %v2559, %v2552
    %v2679 = vpack.c.b16 %v2560, %v2553
    %v2680 = vpack.c.b16 %v2561, %v2554
    %v2681 = vpack.c.b16 %v2562, %v2555
    %v2682 = vpack.c.b16 %v2563, %v2556
    %v2683 = vpack.c.b16 %v2564, %v2557
    %v2684 = vpack.c.b16 %v2565, %v2558
    %v2685 = vpack.c.b16 %v2573, %v2566
    %v2686 = vpack.c.b16 %v2574, %v2567
    %v2687 = vpack.c.b16 %v2575, %v2568
    %v2688 = vpack.c.b16 %v2576, %v2569
    %v2689 = vpack.c.b16 %v2577, %v2570
    %v2690 = vpack.c.b16 %v2578, %v2571
    %v2691 = vpack.c.b16 %v2579, %v2572
    %2804 = vmatpush.bf16.msra.mxu0 %v2629
    %2805 = vmatpush.bf16.msra.mxu0 %v2622
    %2806 = vmatpush.bf16.msra.mxu0 %v2615
    %2807 = vmatpush.bf16.msra.mxu0 %v2608
    %2808 = vmatpush.bf16.msra.mxu0 %v2601
    %2809 = vmatpush.bf16.msra.mxu0 %v2594
    %2810 = vmatpush.bf16.msra.mxu0 %v2587
    %2811 = vmatpush.bf16.msra.mxu0 %v2580
    %2812 = vmatmul.bf16.gmra.mxu0 %v2082
    %v2813 = vpop.f32.mrf.mxu0
    %v2814 = vadd.f32 %v2214, %v2813
    %v2815 = vpop.f32.mrf.mxu0
    %v2816 = vadd.f32 %v2214, %v2815
    %2817 = vdwg.mxu0
    %2818 = vmatpush.bf16.msra.mxu0 %v2685
    %2819 = vmatpush.bf16.msra.mxu0 %v2678
    %2820 = vmatpush.bf16.msra.mxu0 %v2671
    %2821 = vmatpush.bf16.msra.mxu0 %v2664
    %2822 = vmatpush.bf16.msra.mxu0 %v2657
    %2823 = vmatpush.bf16.msra.mxu0 %v2650
    %2824 = vmatpush.bf16.msra.mxu0 %v2643
    %2825 = vmatpush.bf16.msra.mxu0 %v2636
    %2826 = vmatmul.bf16.gmra.mxu0 %v2083
    %v2827 = vpop.f32.mrf.mxu0
    %v2828 = vadd.f32 %v2814, %v2827
    %v2829 = vpop.f32.mrf.mxu0
    %v2830 = vadd.f32 %v2816, %v2829
    %2831 = vdwg.mxu0
    %2832 = vmatpush.bf16.msra.mxu0 %v2630
    %2833 = vmatpush.bf16.msra.mxu0 %v2623
    %2834 = vmatpush.bf16.msra.mxu0 %v2616
    %2835 = vmatpush.bf16.msra.mxu0 %v2609
    %2836 = vmatpush.bf16.msra.mxu0 %v2602
    %2837 = vmatpush.bf16.msra.mxu0 %v2595
    %2838 = vmatpush.bf16.msra.mxu0 %v2588
    %2839 = vmatpush.bf16.msra.mxu0 %v2581
    %2840 = vmatmul.bf16.gmra.mxu0 %v2082
    %v2841 = vpop.f32.mrf.mxu0
    %v2842 = vadd.f32 %v2215, %v2841
    %v2843 = vpop.f32.mrf.mxu0
    %v2844 = vadd.f32 %v2215, %v2843
    %2845 = vdwg.mxu0
    %2846 = vmatpush.bf16.msra.mxu0 %v2686
    %2847 = vmatpush.bf16.msra.mxu0 %v2679
    %2848 = vmatpush.bf16.msra.mxu0 %v2672
    %2849 = vmatpush.bf16.msra.mxu0 %v2665
    %2850 = vmatpush.bf16.msra.mxu0 %v2658
    %2851 = vmatpush.bf16.msra.mxu0 %v2651
    %2852 = vmatpush.bf16.msra.mxu0 %v2644
    %2853 = vmatpush.bf16.msra.mxu0 %v2637
    %2854 = vmatmul.bf16.gmra.mxu0 %v2083
    %v2855 = vpop.f32.mrf.mxu0
    %v2856 = vadd.f32 %v2842, %v2855
    %v2857 = vpop.f32.mrf.mxu0
    %v2858 = vadd.f32 %v2844, %v2857
    %2859 = vdwg.mxu0
    %2860 = vmatpush.bf16.msra.mxu0 %v2631
    %2861 = vmatpush.bf16.msra.mxu0 %v2624
    %2862 = vmatpush.bf16.msra.mxu0 %v2617
    %2863 = vmatpush.bf16.msra.mxu0 %v2610
    %2864 = vmatpush.bf16.msra.mxu0 %v2603
    %2865 = vmatpush.bf16.msra.mxu0 %v2596
    %2866 = vmatpush.bf16.msra.mxu0 %v2589
    %2867 = vmatpush.bf16.msra.mxu0 %v2582
    %2868 = vmatmul.bf16.gmra.mxu0 %v2082
    %v2869 = vpop.f32.mrf.mxu0
    %v2870 = vadd.f32 %v2216, %v2869
    %v2871 = vpop.f32.mrf.mxu0
    %v2872 = vadd.f32 %v2216, %v2871
    %2873 = vdwg.mxu0
    %2874 = vmatpush.bf16.msra.mxu0 %v2687
    %2875 = vmatpush.bf16.msra.mxu0 %v2680
    %2876 = vmatpush.bf16.msra.mxu0 %v2673
    %2877 = vmatpush.bf16.msra.mxu0 %v2666
    %2878 = vmatpush.bf16.msra.mxu0 %v2659
    %2879 = vmatpush.bf16.msra.mxu0 %v2652
    %2880 = vmatpush.bf16.msra.mxu0 %v2645
    %2881 = vmatpush.bf16.msra.mxu0 %v2638
    %2882 = vmatmul.bf16.gmra.mxu0 %v2083
    %v2883 = vpop.f32.mrf.mxu0
    %v2884 = vadd.f32 %v2870, %v2883
    %v2885 = vpop.f32.mrf.mxu0
    %v2886 = vadd.f32 %v2872, %v2885
    %2887 = vdwg.mxu0
    %2888 = vmatpush.bf16.msra.mxu0 %v2632
    %2889 = vmatpush.bf16.msra.mxu0 %v2625
    %2890 = vmatpush.bf16.msra.mxu0 %v2618
    %2891 = vmatpush.bf16.msra.mxu0 %v2611
    %2892 = vmatpush.bf16.msra.mxu0 %v2604
    %2893 = vmatpush.bf16.msra.mxu0 %v2597
    %2894 = vmatpush.bf16.msra.mxu0 %v2590
    %2895 = vmatpush.bf16.msra.mxu0 %v2583
    %2896 = vmatmul.bf16.gmra.mxu0 %v2082
    %v2897 = vpop.f32.mrf.mxu0
    %v2898 = vadd.f32 %v2217, %v2897
    %v2899 = vpop.f32.mrf.mxu0
    %v2900 = vadd.f32 %v2217, %v2899
    %2901 = vdwg.mxu0
    %2902 = vmatpush.bf16.msra.mxu0 %v2688
    %2903 = vmatpush.bf16.msra.mxu0 %v2681
    %2904 = vmatpush.bf16.msra.mxu0 %v2674
    %2905 = vmatpush.bf16.msra.mxu0 %v2667
    %2906 = vmatpush.bf16.msra.mxu0 %v2660
    %2907 = vmatpush.bf16.msra.mxu0 %v2653
    %2908 = vmatpush.bf16.msra.mxu0 %v2646
    %2909 = vmatpush.bf16.msra.mxu0 %v2639
    %2910 = vmatmul.bf16.gmra.mxu0 %v2083
    %v2911 = vpop.f32.mrf.mxu0
    %v2912 = vadd.f32 %v2898, %v2911
    %v2913 = vpop.f32.mrf.mxu0
    %v2914 = vadd.f32 %v2900, %v2913
    %2915 = vdwg.mxu0
    %2916 = vmatpush.bf16.msra.mxu0 %v2633
    %2917 = vmatpush.bf16.msra.mxu0 %v2626
    %2918 = vmatpush.bf16.msra.mxu0 %v2619
    %2919 = vmatpush.bf16.msra.mxu0 %v2612
    %2920 = vmatpush.bf16.msra.mxu0 %v2605
    %2921 = vmatpush.bf16.msra.mxu0 %v2598
    %2922 = vmatpush.bf16.msra.mxu0 %v2591
    %2923 = vmatpush.bf16.msra.mxu0 %v2584
    %2924 = vmatmul.bf16.gmra.mxu0 %v2082
    %v2925 = vpop.f32.mrf.mxu0
    %v2926 = vadd.f32 %v2218, %v2925
    %v2927 = vpop.f32.mrf.mxu0
    %v2928 = vadd.f32 %v2218, %v2927
    %2929 = vdwg.mxu0
    %2930 = vmatpush.bf16.msra.mxu0 %v2689
    %2931 = vmatpush.bf16.msra.mxu0 %v2682
    %2932 = vmatpush.bf16.msra.mxu0 %v2675
    %2933 = vmatpush.bf16.msra.mxu0 %v2668
    %2934 = vmatpush.bf16.msra.mxu0 %v2661
    %2935 = vmatpush.bf16.msra.mxu0 %v2654
    %2936 = vmatpush.bf16.msra.mxu0 %v2647
    %2937 = vmatpush.bf16.msra.mxu0 %v2640
    %2938 = vmatmul.bf16.gmra.mxu0 %v2083
    %v2939 = vpop.f32.mrf.mxu0
    %v2940 = vadd.f32 %v2926, %v2939
    %v2941 = vpop.f32.mrf.mxu0
    %v2942 = vadd.f32 %v2928, %v2941
    %2943 = vdwg.mxu0
    %2944 = vmatpush.bf16.msra.mxu0 %v2634
    %2945 = vmatpush.bf16.msra.mxu0 %v2627
    %2946 = vmatpush.bf16.msra.mxu0 %v2620
    %2947 = vmatpush.bf16.msra.mxu0 %v2613
    %2948 = vmatpush.bf16.msra.mxu0 %v2606
    %2949 = vmatpush.bf16.msra.mxu0 %v2599
    %2950 = vmatpush.bf16.msra.mxu0 %v2592
    %2951 = vmatpush.bf16.msra.mxu0 %v2585
    %2952 = vmatmul.bf16.gmra.mxu0 %v2082
    %v2953 = vpop.f32.mrf.mxu0
    %v2954 = vadd.f32 %v2219, %v2953
    %v2955 = vpop.f32.mrf.mxu0
    %v2956 = vadd.f32 %v2219, %v2955
    %2957 = vdwg.mxu0
    %2958 = vmatpush.bf16.msra.mxu0 %v2690
    %2959 = vmatpush.bf16.msra.mxu0 %v2683
    %2960 = vmatpush.bf16.msra.mxu0 %v2676
    %2961 = vmatpush.bf16.msra.mxu0 %v2669
    %2962 = vmatpush.bf16.msra.mxu0 %v2662
    %2963 = vmatpush.bf16.msra.mxu0 %v2655
    %2964 = vmatpush.bf16.msra.mxu0 %v2648
    %2965 = vmatpush.bf16.msra.mxu0 %v2641
    %2966 = vmatmul.bf16.gmra.mxu0 %v2083
    %v2967 = vpop.f32.mrf.mxu0
    %v2968 = vadd.f32 %v2954, %v2967
    %v2969 = vpop.f32.mrf.mxu0
    %v2970 = vadd.f32 %v2956, %v2969
    %2971 = vdwg.mxu0
    %2972 = vmatpush.bf16.msra.mxu0 %v2635
    %2973 = vmatpush.bf16.msra.mxu0 %v2628
    %2974 = vmatpush.bf16.msra.mxu0 %v2621
    %2975 = vmatpush.bf16.msra.mxu0 %v2614
    %2976 = vmatpush.bf16.msra.mxu0 %v2607
    %2977 = vmatpush.bf16.msra.mxu0 %v2600
    %2978 = vmatpush.bf16.msra.mxu0 %v2593
    %2979 = vmatpush.bf16.msra.mxu0 %v2586
    %2980 = vmatmul.bf16.gmra.mxu0 %v2082
    %v2981 = vpop.f32.mrf.mxu0
    %v2982 = vadd.f32 %v2220, %v2981
    %v2983 = vpop.f32.mrf.mxu0
    %v2984 = vadd.f32 %v2220, %v2983
    %2985 = vdwg.mxu0
    %2986 = vmatpush.bf16.msra.mxu0 %v2691
    %2987 = vmatpush.bf16.msra.mxu0 %v2684
    %2988 = vmatpush.bf16.msra.mxu0 %v2677
    %2989 = vmatpush.bf16.msra.mxu0 %v2670
    %2990 = vmatpush.bf16.msra.mxu0 %v2663
    %2991 = vmatpush.bf16.msra.mxu0 %v2656
    %2992 = vmatpush.bf16.msra.mxu0 %v2649
    %2993 = vmatpush.bf16.msra.mxu0 %v2642
    %2994 = vmatmul.bf16.gmra.mxu0 %v2083
    %v2995 = vpop.f32.mrf.mxu0
    %v2996 = vadd.f32 %v2982, %v2995
    %v2997 = vpop.f32.mrf.mxu0
    %v2998 = vadd.f32 %v2984, %v2997
    %2999 = vdwg.mxu0
    %v3000 = vmul.f32 %v2828, 0.5
    %v3001 = vmul.f32 %v2856, 0.5
    %v3002 = vmul.f32 %v2884, 0.5
    %v3003 = vmul.f32 %v2912, 0.5
    %v3004 = vmul.f32 %v2940, 0.5
    %v3005 = vmul.f32 %v2968, 0.5
    %v3006 = vmul.f32 %v2996, 0.5
    %v3007 = vmul.f32 %v2830, 0.5
    %v3008 = vmul.f32 %v2858, 0.5
    %v3009 = vmul.f32 %v2886, 0.5
    %v3010 = vmul.f32 %v2914, 0.5
    %v3011 = vmul.f32 %v2942, 0.5
    %v3012 = vmul.f32 %v2970, 0.5
    %v3013 = vmul.f32 %v2998, 0.5
    %v3014 = vtanh.pop %v3000
    %v3015 = vtanh.pop %v3001
    %v3016 = vtanh.pop %v3002
    %v3017 = vtanh.pop %v3003
    %v3018 = vtanh.pop %v3004
    %v3019 = vtanh.pop %v3005
    %v3020 = vtanh.pop %v3006
    %v3021 = vtanh.pop %v3007
    %v3022 = vtanh.pop %v3008
    %v3023 = vtanh.pop %v3009
    %v3024 = vtanh.pop %v3010
    %v3025 = vtanh.pop %v3011
    %v3026 = vtanh.pop %v3012
    %v3027 = vtanh.pop %v3013
    %v3028 = vmul.f32 %v3014, 0.5
    %v3029 = vmul.f32 %v3015, 0.5
    %v3030 = vmul.f32 %v3016, 0.5
    %v3031 = vmul.f32 %v3017, 0.5
    %v3032 = vmul.f32 %v3018, 0.5
    %v3033 = vmul.f32 %v3019, 0.5
    %v3034 = vmul.f32 %v3020, 0.5
    %v3035 = vmul.f32 %v3021, 0.5
    %v3036 = vmul.f32 %v3022, 0.5
    %v3037 = vmul.f32 %v3023, 0.5
    %v3038 = vmul.f32 %v3024, 0.5
    %v3039 = vmul.f32 %v3025, 0.5
    %v3040 = vmul.f32 %v3026, 0.5
    %v3041 = vmul.f32 %v3027, 0.5
    %v3042 = vadd.f32 %v3028, 0.5
    %v3043 = vadd.f32 %v3029, 0.5
    %v3044 = vadd.f32 %v3030, 0.5
    %v3045 = vadd.f32 %v3031, 0.5
    %v3046 = vadd.f32 %v3032, 0.5
    %v3047 = vadd.f32 %v3033, 0.5
    %v3048 = vadd.f32 %v3034, 0.5
    %v3049 = vadd.f32 %v3035, 0.5
    %v3050 = vadd.f32 %v3036, 0.5
    %v3051 = vadd.f32 %v3037, 0.5
    %v3052 = vadd.f32 %v3038, 0.5
    %v3053 = vadd.f32 %v3039, 0.5
    %v3054 = vadd.f32 %v3040, 0.5
    %v3055 = vadd.f32 %v3041, 0.5
    %3056 = vst [vmem:[%s10] sm:$0xff] %v3042
    %3057 = vst [vmem:[%s10 + $0x8] sm:$0xff] %v3043
    %3058 = vst [vmem:[%s10 + $0x10] sm:$0xff] %v3044
    %3059 = vst [vmem:[%s10 + $0x18] sm:$0xff] %v3045
    %3060 = vst [vmem:[%s10 + $0x20] sm:$0xff] %v3046
    %3061 = vst [vmem:[%s10 + $0x28] sm:$0xff] %v3047
    %3062 = vst [vmem:[%s10 + $0x30] sm:$0xff] %v3048
    %3063 = vst [vmem:[%s10 + $0x38] sm:$0xff] %v3049
    %3064 = vst [vmem:[%s10 + $0x40] sm:$0xff] %v3050
    %3065 = vst [vmem:[%s10 + $0x48] sm:$0xff] %v3051
    %3066 = vst [vmem:[%s10 + $0x50] sm:$0xff] %v3052
    %3067 = vst [vmem:[%s10 + $0x58] sm:$0xff] %v3053
    %3068 = vst [vmem:[%s10 + $0x60] sm:$0xff] %v3054
    %3069 = vst [vmem:[%s10 + $0x68] sm:$0xff] %v3055
    // Predicated region
    $region58: #{mlp_model_forward.1} parent=1 // pred_check
      _
    $region59: #{mlp_model_forward.1} parent=1 // pred_check_branch
      %3071 = sbr.rel (0) target = $region61
    $region60: #{mlp_model_forward.1} parent=1 // pred_region
      _
    $region61: #{mlp_model_forward.1} parent=1 // pred_fallthru
      _
    // Predicated region
    $region62: #{mlp_model_forward.1} parent=1 // pred_check
      _
    $region63: #{mlp_model_forward.1} parent=1 // pred_check_branch
      %3073 = sbr.rel (0) target = $region65
    $region64: #{mlp_model_forward.1} parent=1 // pred_region
      _
    $region65: #{mlp_model_forward.1} parent=1 // pred_fallthru
      _
    %3074 = vsyncpa [#allocation3], 1
    %3075 = vsyncpa [#allocation5], 1
    %3076 = vsyncpa [#allocation8], 1

</llo_original>
